<compile_context>
chip_gen: v7x
topology: tpu7x:2x2x1
jax: 0.10.0
libtpu: 0.0.40
codegen_flags: <defaults>
</compile_context>

<pallas_src>
import numpy as np
import jax
import jax.numpy as jnp
from jax.experimental import pallas as pl
from jax.experimental.pallas import tpu as pltpu


def silu(x):
    return x * jax.nn.sigmoid(x)


def _round_up(x, m):
    return ((x + m - 1) // m) * m


def _pick_row_tile(r, cap=256):
    """Largest multiple-of-16 row tile dividing r (capped), preferring >= 2
    grid steps so v7x's two TensorCores both get work."""
    for t in (256, 128, 64, 32, 16):
        if t <= cap and r % t == 0 and t < r:
            return t
    return r


# ----------------------------------------------------------------------------
# Pallas kernel: edge MLP -> masked aggregation over K -> node MLP (+ residual)
# One grid step processes TILE_R node rows and their K*TILE_R edge rows.
# ----------------------------------------------------------------------------
def egnn_kernel(fi_ref, fja_ref,
                w1a_ref, w1bc_ref, b1_ref,
                w2_ref, b2_ref,
                w3a_ref, w3b_ref, b3_ref,
                w4_ref, b4_ref,
                out_ref):
    f32 = jnp.float32
    K, T, C = fja_ref.shape                 # [K, TILE_R, D+2]
    D = fi_ref.shape[1]
    cdt = w1a_ref.dtype                     # MXU operand dtype (f32 or bf16)

    fi_c = fi_ref[...].astype(cdt)          # [T, D] node rows, matmul operand

    # ---- edge MLP layer 1: [feats_i | feats_j | rel_dist] @ W1 + b1 ----
    # node-side part, computed once per node and broadcast over K (free on VPU)
    h_i = jnp.dot(fi_c, w1a_ref[...], preferred_element_type=f32)          # [T, He]
    # neighbor-side part: fj @ w1b + rd * w1c (+ em * 0) in one matmul.
    # The [K, T, C] -> [K*T, C] merge is layout-preserving (T % 16 == 0).
    fja2 = fja_ref[...].reshape(K * T, C)
    h_j = jnp.dot(fja2, w1bc_ref[...], preferred_element_type=f32)         # [K*T, He]
    He = h_j.shape[-1]
    h = silu(h_j.reshape(K, T, He) + h_i[None, :, :] + b1_ref[...])        # [K, T, He] f32

    # ---- edge MLP layer 2, mask invalid edges, aggregate over K ----
    m = silu(jnp.dot(h.reshape(K * T, He).astype(cdt), w2_ref[...],
                     preferred_element_type=f32) + b2_ref[...])            # [K*T, M] f32
    Mdim = m.shape[-1]
    em = fja_ref[:, :, D + 1:D + 2].astype(f32)                            # [K, T, 1] edge validity (0/1)
    m_i = jnp.sum(m.reshape(K, T, Mdim) * em, axis=0)                      # [T, M]  masked sum over neighbors

    # ---- node MLP (split W3: no lane concat) + residual ----
    acc = jnp.dot(fi_c, w3a_ref[...], preferred_element_type=f32)          # [T, 2D]
    acc = acc + jnp.dot(m_i.astype(cdt), w3b_ref[...], preferred_element_type=f32)
    h2 = silu(acc + b3_ref[...])
    out = jnp.dot(h2.astype(cdt), w4_ref[...], preferred_element_type=f32) + b4_ref[...]
    # re-read fi for the residual (keeps its live range short across the MLPs)
    out_ref[...] = (out + fi_ref[...]).astype(out_ref.dtype)


# ----------------------------------------------------------------------------
# Parameter prep (done once, not per traced call)
# ----------------------------------------------------------------------------
def prepare_params(params, compute_dtype=jnp.float32):
    """params = (w1a, w1b, w1c, b1, w2, b2, w3a, w3b, b3, w4, b4), weights as
    [in_features, out_features].  Folds the rel_dist weight column into the
    neighbor-side layer-1 weight; a zero row cancels the mask column."""
    (w1a, w1b, w1c, b1, w2, b2, w3a, w3b, b3, w4, b4) = params
    He = w1b.shape[1]
    w1bc = jnp.concatenate([w1b, w1c, jnp.zeros((1, He), w1b.dtype)], axis=0)  # [D+2, He]
    cd = compute_dtype
    f32 = jnp.float32
    # weights in the MXU operand dtype; biases stay f32 (added to f32 accumulators)
    return (w1a.astype(cd), w1bc.astype(cd), b1.astype(f32),
            w2.astype(cd), b2.astype(f32),
            w3a.astype(cd), w3b.astype(cd), b3.astype(f32),
            w4.astype(cd), b4.astype(f32))


# ----------------------------------------------------------------------------
# Wrapper: JAX glue (neighborhood selection, gathers, layout) + pallas_call
# ----------------------------------------------------------------------------
def egnn_pallas(feats, coors, mask, adj_mat, prepared_params, num_nearest,
                *, compute_dtype=jnp.float32):
    B, N, D = feats.shape
    K = num_nearest
    R = B * N

    # ---- glue: distances, ranking, topk neighborhood selection ----
    rel_coors = coors[:, :, None, :] - coors[:, None, :, :]          # [B,N,N,3]
    rel_dist = jnp.sum(rel_coors ** 2, axis=-1)                      # [B,N,N]
    ranking = rel_dist
    rank_mask = mask[:, :, None] & mask[:, None, :]
    ranking = jnp.where(rank_mask, ranking, 100000.0)
    self_mask = jnp.eye(N, dtype=bool)[None]
    adj = jnp.where(self_mask, False, adj_mat)
    ranking = jnp.where(self_mask, -1.0, ranking)
    ranking = jnp.where(adj, 0.0, ranking)

    # TODO(synk): torch.topk(largest=False) neighbor selection has no Pallas
    # equivalent (data-dependent gather); done in plain JAX. Tie-breaking may
    # differ from torch when many ranking entries are exactly 0.0.
    neg_vals, nbhd_idx = jax.lax.top_k(-ranking, K)                  # K smallest
    nbhd_ranking = -neg_vals                                         # [B,N,K]
    nbhd_mask = nbhd_ranking <= 0.0                                  # valid_radius = 0

    rel_dist_g = jnp.take_along_axis(rel_dist, nbhd_idx, axis=2)     # [B,N,K]
    feats_j = jax.vmap(lambda f, idx: f[idx])(feats, nbhd_idx)       # [B,N,K,D]
    mask_j = jax.vmap(lambda m, idx: m[idx])(mask, nbhd_idx)         # [B,N,K]
    edge_mask = (mask[:, :, None] & mask_j) & nbhd_mask              # [B,N,K]

    # ---- neighbor-major edge block: fja[k, b*N + n, :] = [fj | rd | em] ----
    fj_km = jnp.transpose(feats_j, (2, 0, 1, 3)).reshape(K, R, D)
    rd_km = jnp.transpose(rel_dist_g, (2, 0, 1)).reshape(K, R, 1)
    em_km = jnp.transpose(edge_mask, (2, 0, 1)).astype(jnp.float32).reshape(K, R, 1)
    fja = jnp.concatenate([fj_km, rd_km, em_km], axis=-1).astype(compute_dtype)  # [K, R, D+2]
    fi_flat = feats.reshape(R, D).astype(jnp.float32)                            # [R, D] f32 (residual precision)

    # pad node rows to a multiple of 16 so row tiles stay sublane-aligned for
    # both f32 (8-row tiles) and bf16 (16-row tiles); padded rows are sliced off.
    R_pad = _round_up(R, 16)
    if R_pad != R:
        fi_flat = jnp.pad(fi_flat, ((0, R_pad - R), (0, 0)))
        fja = jnp.pad(fja, ((0, 0), (0, R_pad - R), (0, 0)))

    tile_r = _pick_row_tile(R_pad)
    grid = (R_pad // tile_r,)

    (w1a, w1bc, b1, w2, b2, w3a, w3b, b3, w4, b4) = prepared_params
    weights = (w1a, w1bc, b1, w2, b2, w3a, w3b, b3, w4, b4)

    def const_spec(a):
        nd = a.ndim
        return pl.BlockSpec(a.shape, lambda i, _nd=nd: (0,) * _nd)   # VMEM-resident

    in_specs = ([pl.BlockSpec((tile_r, D), lambda i: (i, 0)),
                 pl.BlockSpec((K, tile_r, D + 2), lambda i: (0, i, 0))]
                + [const_spec(w) for w in weights])

    out_flat = pl.pallas_call(
        egnn_kernel,
        out_shape=jax.ShapeDtypeStruct((R_pad, D), jnp.float32),
        grid=grid,
        in_specs=in_specs,
        out_specs=pl.BlockSpec((tile_r, D), lambda i: (i, 0)),
        compiler_params=pltpu.CompilerParams(dimension_semantics=("parallel",)),
    )(fi_flat, fja, *weights)

    node_out = out_flat[:R].reshape(B, N, D)
    return node_out, coors


# ----------------------------------------------------------------------------
# Pure-JAX reference (mirrors the PyTorch forward) for validation
# ----------------------------------------------------------------------------
def egnn_reference(feats, coors, mask, adj_mat, params, num_nearest):
    B, N, D = feats.shape
    K = num_nearest
    (w1a, w1b, w1c, b1, w2, b2, w3a, w3b, b3, w4, b4) = params

    rel_coors = coors[:, :, None, :] - coors[:, None, :, :]
    rel_dist = jnp.sum(rel_coors ** 2, axis=-1)
    ranking = rel_dist
    rank_mask = mask[:, :, None] & mask[:, None, :]
    ranking = jnp.where(rank_mask, ranking, 100000.0)
    self_mask = jnp.eye(N, dtype=bool)[None]
    adj = jnp.where(self_mask, False, adj_mat)
    ranking = jnp.where(self_mask, -1.0, ranking)
    ranking = jnp.where(adj, 0.0, ranking)
    neg_vals, nbhd_idx = jax.lax.top_k(-ranking, K)
    nbhd_ranking = -neg_vals
    nbhd_mask = nbhd_ranking <= 0.0

    rel_dist_g = jnp.take_along_axis(rel_dist, nbhd_idx, axis=2)[..., None]  # [B,N,K,1]
    feats_j = jax.vmap(lambda f, idx: f[idx])(feats, nbhd_idx)               # [B,N,K,D]
    feats_i = jnp.broadcast_to(feats[:, :, None, :], feats_j.shape)
    mask_j = jax.vmap(lambda m, idx: m[idx])(mask, nbhd_idx)
    edge_mask = (mask[:, :, None] & mask_j) & nbhd_mask

    edge_input = jnp.concatenate([feats_i, feats_j, rel_dist_g], axis=-1)    # [B,N,K,2D+1]
    W1 = jnp.concatenate([w1a, w1b, w1c], axis=0)                            # [2D+1, He]
    h = silu(edge_input @ W1 + b1[0])
    m_ij = silu(h @ w2 + b2[0])
    m_ij = jnp.where(edge_mask[..., None], m_ij, 0.0)
    m_i = m_ij.sum(axis=-2)                                                  # [B,N,M]

    W3 = jnp.concatenate([w3a, w3b], axis=0)                                 # [D+M, 2D]
    node_in = jnp.concatenate([feats, m_i], axis=-1)
    h2 = silu(node_in @ W3 + b3[0])
    node_out = h2 @ w4 + b4[0] + feats
    return node_out, coors


if __name__ == "__main__":
    B, N, D = 2, 16, 32           # batch, residues, hidden dim
    He, M = 32, 16                # hidden_edge_dim, m_dim
    Ein = 2 * D + 1

    key = jax.random.PRNGKey(0)
    ks = jax.random.split(key, 12)
    std = 1e-3                    # init_eps

    w1 = std * jax.random.normal(ks[0], (Ein, He), jnp.float32)
    w1a, w1b, w1c = w1[:D], w1[D:2 * D], w1[2 * D:]
    b1 = 0.01 * jax.random.normal(ks[1], (1, He), jnp.float32)
    w2 = std * jax.random.normal(ks[2], (He, M), jnp.float32)
    b2 = 0.01 * jax.random.normal(ks[3], (1, M), jnp.float32)
    w3 = std * jax.random.normal(ks[4], (D + M, 2 * D), jnp.float32)
    w3a, w3b = w3[:D], w3[D:]
    b3 = 0.01 * jax.random.normal(ks[5], (1, 2 * D), jnp.float32)
    w4 = std * jax.random.normal(ks[6], (2 * D, D), jnp.float32)
    b4 = 0.01 * jax.random.normal(ks[7], (1, D), jnp.float32)
    params = (w1a, w1b, w1c, b1, w2, b2, w3a, w3b, b3, w4, b4)

    feats = jax.random.normal(ks[8], (B, N, D), jnp.float32)
    coors = jax.random.normal(ks[9], (B, N, 3), jnp.float32)

    mask_np = np.ones((B, N), dtype=bool)
    mask_np[1, -3:] = False
    mask = jnp.asarray(mask_np)

    # band adjacency |i-j| <= 2 (max row degree 5, including diagonal)
    idx = np.arange(N)
    adj_np = (np.abs(idx[:, None] - idx[None, :]) <= 2)
    adj_np = np.broadcast_to(adj_np, (B, N, N)).copy()
    adj_mat = jnp.asarray(adj_np)

    # num_nearest is a host-side Python int in the PyTorch module too
    num_nearest = int(adj_np.astype(np.float32).sum(-1).max())

    ref_out, _ = egnn_reference(feats, coors, mask, adj_mat, params, num_nearest)
    ref_np = np.asarray(jax.block_until_ready(ref_out))

    # f32 MXU operands: tight check against the f32 reference.
    p_f32 = prepare_params(params, jnp.float32)
    out_f32, _ = egnn_pallas(feats, coors, mask, adj_mat, p_f32, num_nearest,
                             compute_dtype=jnp.float32)
    out_f32 = jax.block_until_ready(out_f32)
    np.testing.assert_allclose(np.asarray(out_f32), ref_np, rtol=1e-5, atol=1e-5)

    # bf16 MXU operands (v6e/v7x fast path): f32 accumulate + f32 elementwise,
    # documented looser tolerance vs the f32 reference.
    p_bf16 = prepare_params(params, jnp.bfloat16)
    out_bf16, _ = egnn_pallas(feats, coors, mask, adj_mat, p_bf16, num_nearest,
                              compute_dtype=jnp.bfloat16)
    out_bf16 = jax.block_until_ready(out_bf16)
    np.testing.assert_allclose(np.asarray(out_bf16), ref_np, rtol=1e-2, atol=2e-3)

    print("KERNEL_OK")
</pallas_src>

<mosaic_0001>
module attributes {stable_mosaic.version = 11 : i64} {
  func.func @egnn_kernel(%arg0: i32, %arg1: memref<16x32xf32, #tpu.memory_space<vmem>>, %arg2: memref<5x16x34xf32, #tpu.memory_space<vmem>>, %arg3: memref<32x32xf32, #tpu.memory_space<vmem>>, %arg4: memref<34x32xf32, #tpu.memory_space<vmem>>, %arg5: memref<1x32xf32, #tpu.memory_space<vmem>>, %arg6: memref<32x16xf32, #tpu.memory_space<vmem>>, %arg7: memref<1x16xf32, #tpu.memory_space<vmem>>, %arg8: memref<32x64xf32, #tpu.memory_space<vmem>>, %arg9: memref<16x64xf32, #tpu.memory_space<vmem>>, %arg10: memref<1x64xf32, #tpu.memory_space<vmem>>, %arg11: memref<64x32xf32, #tpu.memory_space<vmem>>, %arg12: memref<1x32xf32, #tpu.memory_space<vmem>>, %arg13: memref<16x32xf32, #tpu.memory_space<vmem>>) attributes {dimension_semantics = [#tpu.dimension_semantics<parallel>], iteration_bounds = array<i64: 2>, scalar_prefetch = 0 : i64, scratch_operands = 0 : i64, tpu.core_type = #tpu.core_type<tc>, window_params = [{transform_indices = @transform_0, window_bounds = array<i64: 16, 32>}, {transform_indices = @transform_1, window_bounds = array<i64: 5, 16, 34>}, {pipeline_mode = #tpu.pipeline_mode<synchronous>, transform_indices = @transform_2, window_bounds = array<i64: 32, 32>}, {pipeline_mode = #tpu.pipeline_mode<synchronous>, transform_indices = @transform_3, window_bounds = array<i64: 34, 32>}, {pipeline_mode = #tpu.pipeline_mode<synchronous>, transform_indices = @transform_4, window_bounds = array<i64: 1, 32>}, {pipeline_mode = #tpu.pipeline_mode<synchronous>, transform_indices = @transform_5, window_bounds = array<i64: 32, 16>}, {pipeline_mode = #tpu.pipeline_mode<synchronous>, transform_indices = @transform_6, window_bounds = array<i64: 1, 16>}, {pipeline_mode = #tpu.pipeline_mode<synchronous>, transform_indices = @transform_7, window_bounds = array<i64: 32, 64>}, {pipeline_mode = #tpu.pipeline_mode<synchronous>, transform_indices = @transform_8, window_bounds = array<i64: 16, 64>}, {pipeline_mode = #tpu.pipeline_mode<synchronous>, transform_indices = @transform_9, window_bounds = array<i64: 1, 64>}, {pipeline_mode = #tpu.pipeline_mode<synchronous>, transform_indices = @transform_10, window_bounds = array<i64: 64, 32>}, {pipeline_mode = #tpu.pipeline_mode<synchronous>, transform_indices = @transform_11, window_bounds = array<i64: 1, 32>}, {transform_indices = @transform_12, window_bounds = array<i64: 16, 32>}]} {
    %c0 = arith.constant 0 : index
    %c0_0 = arith.constant 0 : index
    %0 = vector.load %arg1[%c0, %c0_0] : memref<16x32xf32, #tpu.memory_space<vmem>>, vector<16x32xf32>
    %c0_1 = arith.constant 0 : index
    %c0_2 = arith.constant 0 : index
    %1 = vector.load %arg3[%c0_1, %c0_2] : memref<32x32xf32, #tpu.memory_space<vmem>>, vector<32x32xf32>
    %cst = arith.constant dense<0.000000e+00> : vector<16x32xf32>
    %2 = tpu.matmul %0, %1, %cst {dimension_numbers = #tpu.dot_dimension_numbers<[1], [0], [0], [1], [0, 0, 1, 1], [], []>} : vector<16x32xf32>, vector<32x32xf32>, vector<16x32xf32> -> vector<16x32xf32>
    %c0_3 = arith.constant 0 : index
    %c0_4 = arith.constant 0 : index
    %c0_5 = arith.constant 0 : index
    %3 = vector.load %arg2[%c0_3, %c0_4, %c0_5] : memref<5x16x34xf32, #tpu.memory_space<vmem>>, vector<5x16x34xf32>
    %4 = vector.shape_cast %3 : vector<5x16x34xf32> to vector<80x34xf32>
    %c0_6 = arith.constant 0 : index
    %c0_7 = arith.constant 0 : index
    %5 = vector.load %arg4[%c0_6, %c0_7] : memref<34x32xf32, #tpu.memory_space<vmem>>, vector<34x32xf32>
    %cst_8 = arith.constant dense<0.000000e+00> : vector<80x32xf32>
    %6 = tpu.matmul %4, %5, %cst_8 {dimension_numbers = #tpu.dot_dimension_numbers<[1], [0], [0], [1], [0, 0, 1, 1], [], []>} : vector<80x34xf32>, vector<34x32xf32>, vector<80x32xf32> -> vector<80x32xf32>
    %7 = vector.shape_cast %6 : vector<80x32xf32> to vector<5x16x32xf32>
    %8 = vector.shape_cast %2 : vector<16x32xf32> to vector<1x16x32xf32>
    %9 = vector.broadcast %8 : vector<1x16x32xf32> to vector<5x16x32xf32>
    %10 = arith.addf %7, %9 : vector<5x16x32xf32>
    %c0_9 = arith.constant 0 : index
    %c0_10 = arith.constant 0 : index
    %11 = vector.load %arg5[%c0_9, %c0_10] : memref<1x32xf32, #tpu.memory_space<vmem>>, vector<1x32xf32>
    %12 = vector.shape_cast %11 : vector<1x32xf32> to vector<1x1x32xf32>
    %13 = vector.broadcast %12 : vector<1x1x32xf32> to vector<5x16x32xf32>
    %14 = arith.addf %10, %13 : vector<5x16x32xf32>
    %15 = arith.negf %14 : vector<5x16x32xf32>
    %16 = math.exp %15 : vector<5x16x32xf32>
    %cst_11 = arith.constant 1.000000e+00 : f32
    %17 = vector.broadcast %cst_11 : f32 to vector<5x16x32xf32>
    %18 = arith.addf %17, %16 : vector<5x16x32xf32>
    %19 = arith.divf %17, %18 : vector<5x16x32xf32>
    %20 = arith.mulf %14, %19 : vector<5x16x32xf32>
    %21 = vector.shape_cast %20 : vector<5x16x32xf32> to vector<80x32xf32>
    %c0_12 = arith.constant 0 : index
    %c0_13 = arith.constant 0 : index
    %22 = vector.load %arg6[%c0_12, %c0_13] : memref<32x16xf32, #tpu.memory_space<vmem>>, vector<32x16xf32>
    %cst_14 = arith.constant dense<0.000000e+00> : vector<80x16xf32>
    %23 = tpu.matmul %21, %22, %cst_14 {dimension_numbers = #tpu.dot_dimension_numbers<[1], [0], [0], [1], [0, 0, 1, 1], [], []>} : vector<80x32xf32>, vector<32x16xf32>, vector<80x16xf32> -> vector<80x16xf32>
    %c0_15 = arith.constant 0 : index
    %c0_16 = arith.constant 0 : index
    %24 = vector.load %arg7[%c0_15, %c0_16] : memref<1x16xf32, #tpu.memory_space<vmem>>, vector<1x16xf32>
    %25 = vector.broadcast %24 : vector<1x16xf32> to vector<80x16xf32>
    %26 = arith.addf %23, %25 : vector<80x16xf32>
    %27 = arith.negf %26 : vector<80x16xf32>
    %28 = math.exp %27 : vector<80x16xf32>
    %cst_17 = arith.constant 1.000000e+00 : f32
    %29 = vector.broadcast %cst_17 : f32 to vector<80x16xf32>
    %30 = arith.addf %29, %28 : vector<80x16xf32>
    %31 = arith.divf %29, %30 : vector<80x16xf32>
    %32 = arith.mulf %26, %31 : vector<80x16xf32>
    %c0_18 = arith.constant 0 : index
    %c0_19 = arith.constant 0 : index
    %c33 = arith.constant 33 : index
    %33 = vector.load %arg2[%c0_18, %c0_19, %c33] : memref<5x16x34xf32, #tpu.memory_space<vmem>>, vector<5x16x1xf32>
    %34 = vector.shape_cast %32 : vector<80x16xf32> to vector<5x16x16xf32>
    %35 = vector.broadcast %33 : vector<5x16x1xf32> to vector<5x16x16xf32>
    %36 = arith.mulf %34, %35 : vector<5x16x16xf32>
    %cst_20 = arith.constant dense<0.000000e+00> : vector<16x16xf32>
    %37 = vector.multi_reduction <add>, %36, %cst_20 [0] : vector<5x16x16xf32> to vector<16x16xf32>
    %c0_21 = arith.constant 0 : index
    %c0_22 = arith.constant 0 : index
    %38 = vector.load %arg8[%c0_21, %c0_22] : memref<32x64xf32, #tpu.memory_space<vmem>>, vector<32x64xf32>
    %cst_23 = arith.constant dense<0.000000e+00> : vector<16x64xf32>
    %39 = tpu.matmul %0, %38, %cst_23 {dimension_numbers = #tpu.dot_dimension_numbers<[1], [0], [0], [1], [0, 0, 1, 1], [], []>} : vector<16x32xf32>, vector<32x64xf32>, vector<16x64xf32> -> vector<16x64xf32>
    %c0_24 = arith.constant 0 : index
    %c0_25 = arith.constant 0 : index
    %40 = vector.load %arg9[%c0_24, %c0_25] : memref<16x64xf32, #tpu.memory_space<vmem>>, vector<16x64xf32>
    %cst_26 = arith.constant dense<0.000000e+00> : vector<16x64xf32>
    %41 = tpu.matmul %37, %40, %cst_26 {dimension_numbers = #tpu.dot_dimension_numbers<[1], [0], [0], [1], [0, 0, 1, 1], [], []>} : vector<16x16xf32>, vector<16x64xf32>, vector<16x64xf32> -> vector<16x64xf32>
    %42 = arith.addf %39, %41 : vector<16x64xf32>
    %c0_27 = arith.constant 0 : index
    %c0_28 = arith.constant 0 : index
    %43 = vector.load %arg10[%c0_27, %c0_28] : memref<1x64xf32, #tpu.memory_space<vmem>>, vector<1x64xf32>
    %44 = vector.broadcast %43 : vector<1x64xf32> to vector<16x64xf32>
    %45 = arith.addf %42, %44 : vector<16x64xf32>
    %46 = arith.negf %45 : vector<16x64xf32>
    %47 = math.exp %46 : vector<16x64xf32>
    %cst_29 = arith.constant 1.000000e+00 : f32
    %48 = vector.broadcast %cst_29 : f32 to vector<16x64xf32>
    %49 = arith.addf %48, %47 : vector<16x64xf32>
    %50 = arith.divf %48, %49 : vector<16x64xf32>
    %51 = arith.mulf %45, %50 : vector<16x64xf32>
    %c0_30 = arith.constant 0 : index
    %c0_31 = arith.constant 0 : index
    %52 = vector.load %arg11[%c0_30, %c0_31] : memref<64x32xf32, #tpu.memory_space<vmem>>, vector<64x32xf32>
    %cst_32 = arith.constant dense<0.000000e+00> : vector<16x32xf32>
    %53 = tpu.matmul %51, %52, %cst_32 {dimension_numbers = #tpu.dot_dimension_numbers<[1], [0], [0], [1], [0, 0, 1, 1], [], []>} : vector<16x64xf32>, vector<64x32xf32>, vector<16x32xf32> -> vector<16x32xf32>
    %c0_33 = arith.constant 0 : index
    %c0_34 = arith.constant 0 : index
    %54 = vector.load %arg12[%c0_33, %c0_34] : memref<1x32xf32, #tpu.memory_space<vmem>>, vector<1x32xf32>
    %55 = vector.broadcast %54 : vector<1x32xf32> to vector<16x32xf32>
    %56 = arith.addf %53, %55 : vector<16x32xf32>
    %c0_35 = arith.constant 0 : index
    %c0_36 = arith.constant 0 : index
    %57 = vector.load %arg1[%c0_35, %c0_36] : memref<16x32xf32, #tpu.memory_space<vmem>>, vector<16x32xf32>
    %58 = arith.addf %56, %57 : vector<16x32xf32>
    %c0_37 = arith.constant 0 : index
    %c0_38 = arith.constant 0 : index
    %59 = vector.load %arg13[%c0_37, %c0_38] : memref<16x32xf32, #tpu.memory_space<vmem>>, vector<16x32xf32>
    tpu.vector_store %arg13[%c0_37, %c0_38], %58 {strides = array<i32>} : memref<16x32xf32, #tpu.memory_space<vmem>>, vector<16x32xf32>,
    return
  }
  func.func @transform_0(%arg0: i32) -> (i32, i32) {
    %c0_i32 = arith.constant 0 : i32
    %c0_i32_0 = arith.constant 0 : i32
    return %arg0, %c0_i32 : i32, i32
  }
  func.func @transform_1(%arg0: i32) -> (i32, i32, i32) {
    %c0_i32 = arith.constant 0 : i32
    %c0_i32_0 = arith.constant 0 : i32
    %c0_i32_1 = arith.constant 0 : i32
    return %c0_i32, %arg0, %c0_i32_0 : i32, i32, i32
  }
  func.func @transform_2(%arg0: i32) -> (i32, i32) {
    %c0_i32 = arith.constant 0 : i32
    %c0_i32_0 = arith.constant 0 : i32
    %c0_i32_1 = arith.constant 0 : i32
    return %c0_i32, %c0_i32_0 : i32, i32
  }
  func.func @transform_3(%arg0: i32) -> (i32, i32) {
    %c0_i32 = arith.constant 0 : i32
    %c0_i32_0 = arith.constant 0 : i32
    %c0_i32_1 = arith.constant 0 : i32
    return %c0_i32, %c0_i32_0 : i32, i32
  }
  func.func @transform_4(%arg0: i32) -> (i32, i32) {
    %c0_i32 = arith.constant 0 : i32
    %c0_i32_0 = arith.constant 0 : i32
    %c0_i32_1 = arith.constant 0 : i32
    return %c0_i32, %c0_i32_0 : i32, i32
  }
  func.func @transform_5(%arg0: i32) -> (i32, i32) {
    %c0_i32 = arith.constant 0 : i32
    %c0_i32_0 = arith.constant 0 : i32
    %c0_i32_1 = arith.constant 0 : i32
    return %c0_i32, %c0_i32_0 : i32, i32
  }
  func.func @transform_6(%arg0: i32) -> (i32, i32) {
    %c0_i32 = arith.constant 0 : i32
    %c0_i32_0 = arith.constant 0 : i32
    %c0_i32_1 = arith.constant 0 : i32
    return %c0_i32, %c0_i32_0 : i32, i32
  }
  func.func @transform_7(%arg0: i32) -> (i32, i32) {
    %c0_i32 = arith.constant 0 : i32
    %c0_i32_0 = arith.constant 0 : i32
    %c0_i32_1 = arith.constant 0 : i32
    return %c0_i32, %c0_i32_0 : i32, i32
  }
  func.func @transform_8(%arg0: i32) -> (i32, i32) {
    %c0_i32 = arith.constant 0 : i32
    %c0_i32_0 = arith.constant 0 : i32
    %c0_i32_1 = arith.constant 0 : i32
    return %c0_i32, %c0_i32_0 : i32, i32
  }
  func.func @transform_9(%arg0: i32) -> (i32, i32) {
    %c0_i32 = arith.constant 0 : i32
    %c0_i32_0 = arith.constant 0 : i32
    %c0_i32_1 = arith.constant 0 : i32
    return %c0_i32, %c0_i32_0 : i32, i32
  }
  func.func @transform_10(%arg0: i32) -> (i32, i32) {
    %c0_i32 = arith.constant 0 : i32
    %c0_i32_0 = arith.constant 0 : i32
    %c0_i32_1 = arith.constant 0 : i32
    return %c0_i32, %c0_i32_0 : i32, i32
  }
  func.func @transform_11(%arg0: i32) -> (i32, i32) {
    %c0_i32 = arith.constant 0 : i32
    %c0_i32_0 = arith.constant 0 : i32
    %c0_i32_1 = arith.constant 0 : i32
    return %c0_i32, %c0_i32_0 : i32, i32
  }
  func.func @transform_12(%arg0: i32) -> (i32, i32) {
    %c0_i32 = arith.constant 0 : i32
    %c0_i32_0 = arith.constant 0 : i32
    return %arg0, %c0_i32 : i32, i32
  }
}

</mosaic_0001>

<llo_original>
// kernel: tpu_custom_call.1
$region0: #{tpu_custom_call.1}
  #allocation0 [shape = 'u32[]', space=smem, size = 0x4, offset = 0x4, fixed_abs, tag = 'smem constant byte address 0x4 - core index']
  #allocation1 [shape = 'u32[144,128]{1,0:T(1,128)}', space=vmem, size = 0x12000, scoped, tag = 'internal scratch']
  %s0 = inlined_call_operand.hbm [shape: f32[32,32], index: 0, kind: input, shape index: {}]
  %s1 = inlined_call_operand.vmem [shape: f32[5,32,34], index: 1, kind: input, shape index: {}]
  %s2 = inlined_call_operand.hbm [shape: f32[32,32], index: 2, kind: input, shape index: {}]
  %s3 = inlined_call_operand.vmem [shape: f32[34,32], index: 3, kind: input, shape index: {}]
  %s4 = inlined_call_operand.vmem [shape: f32[1,32], index: 4, kind: input, shape index: {}]
  %s5 = inlined_call_operand.vmem [shape: f32[32,16], index: 5, kind: input, shape index: {}]
  %s6 = inlined_call_operand.vmem [shape: f32[1,16], index: 6, kind: input, shape index: {}]
  %s7 = inlined_call_operand.vmem [shape: f32[32,64], index: 7, kind: input, shape index: {}]
  %s8 = inlined_call_operand.vmem [shape: f32[16,64], index: 8, kind: input, shape index: {}]
  %s9 = inlined_call_operand.vmem [shape: f32[1,64], index: 9, kind: input, shape index: {}]
  %s10 = inlined_call_operand.vmem [shape: f32[64,32], index: 10, kind: input, shape index: {}]
  %s11 = inlined_call_operand.vmem [shape: f32[1,32], index: 11, kind: input, shape index: {}]
  %s12 = inlined_call_operand.hbm [shape: f32[32,32], index: 12, kind: output, shape index: {}]
  %s13 = sld [smem:[#allocation0]]
  $region127: #{tpu_custom_call.1} parent=0
    _
  %s15 = ssub.s32 1, %s13
  %s16 = scalar_select 0, %s15, %s13
  $region1: #{tpu_custom_call.1} parent=0
    #allocation2 [shape = 'u8[16384]{0}', space=vmem, size = 0x4000, scoped, tag = 'input window, operand 0']
    #allocation3 [shape = 's32[2]{0}', space=sflag, size = 0x8, scoped, tag = 'scoped memory for tpu_custom_call.1']
    #allocation4 [shape = 's32[2]{0}', space=sflag, size = 0x8, scoped, tag = 'scoped memory for tpu_custom_call.1']
    #allocation5 [shape = 'u8[81920]{0}', space=vmem, size = 0x14000, scoped, tag = 'input window, operand 1']
    #allocation6 [shape = 'u8[16384]{0}', space=vmem, size = 0x4000, scoped, tag = 'input window, operand 2, single buffered']
    #allocation7 [shape = 's32[1]{0}', space=sflag, size = 0x4, scoped, tag = 'scoped memory for tpu_custom_call.1']
    #allocation8 [shape = 'u8[16384]{0}', space=vmem, size = 0x4000, scoped, tag = 'output window, operand 0']
    %17 = vsyncpa [#allocation3], 0
    %s18 = scalar_lea.sflag [#allocation3], 1
    %19 = vsyncpa %s18, 0
    %20 = vsyncpa [#allocation7], 0
    %21 = vsyncpa [#allocation4], 0
    %s22 = scalar_lea.sflag [#allocation4], 1
    %23 = vsyncpa %s22, 0
    loop: start=0, step=1, limit=4
    $region2: #{tpu_custom_call.1} parent=1 // loop_pre_header
      _
    $region3: #{tpu_custom_call.1} parent=1 // loop_header
      %s25 = sphi 0, %s29
      %p26 = scmp.ge.s32.totalorder %s25, 4
      %s35 = sphi 0, %s37
      %s38 = sphi 0, %s35
      %s39 = sphi 0, %s38
      %s55 = sphi 0, %s39
      %s61 = sphi 0, %s63
      %s64 = sphi 0, %s61
      %s65 = sphi 0, %s64
      %s81 = sphi 0, %s65
      %s85 = sphi 0, %s85
      %s87 = sphi 0, %s85
      %s88 = sphi 0, %s87
      %s102 = sphi 0, %s88
      %s106 = sphi 0, %s106
      %s108 = sphi 0, %s106
      %s109 = sphi 0, %s108
      %s123 = sphi 0, %s109
      %s127 = sphi 0, %s127
      %s129 = sphi 0, %s127
      %s130 = sphi 0, %s129
      %s144 = sphi 0, %s130
      %s148 = sphi 0, %s148
      %s150 = sphi 0, %s148
      %s151 = sphi 0, %s150
      %s165 = sphi 0, %s151
      %s169 = sphi 0, %s169
      %s171 = sphi 0, %s169
      %s172 = sphi 0, %s171
      %s186 = sphi 0, %s172
      %s190 = sphi 0, %s190
      %s192 = sphi 0, %s190
      %s193 = sphi 0, %s192
      %s207 = sphi 0, %s193
      %s211 = sphi 0, %s211
      %s213 = sphi 0, %s211
      %s214 = sphi 0, %s213
      %s228 = sphi 0, %s214
      %s232 = sphi 0, %s232
      %s234 = sphi 0, %s232
      %s235 = sphi 0, %s234
      %s249 = sphi 0, %s235
      %s253 = sphi 0, %s253
      %s255 = sphi 0, %s253
      %s256 = sphi 0, %s255
      %s270 = sphi 0, %s256
      %s274 = sphi 0, %s274
      %s276 = sphi 0, %s274
      %s277 = sphi 0, %s276
      %s291 = sphi 0, %s277
      %s297 = sphi 0, %s299
      %s300 = sphi 0, %s297
      %s301 = sphi 0, %s300
      %s317 = sphi 0, %s301
    $region4: #{tpu_custom_call.1} parent=1 // loop_header_branch
      %28 = sbr.rel (%p26) target = $region8
    $region5: #{tpu_custom_call.1} parent=1 // loop_body
      %s30 = ssub.s32 %s25, 1
      %s31 = ssub.s32 %s25, 2
      %s32 = sadd.s32 %s25, 1
      %s33 = ssub.s32 %s25, %s32
      %p34 = scmp.eq.s32.totalorder %s33, 0
      %s36 = sadd.s32 %s35, 1
      %s37 = scalar_select %p34, %s35, %s36
      %p40 = pneg %p34
      %p41 = scmp.eq.s32.totalorder %s25, 1
      %p42 = por %p40, %p41
      %p43 = scmp.ne.s32.totalorder %s35, %s38
      %p44 = scmp.eq.s32.totalorder %s25, 0
      %p45 = por %p43, %p44
      %p46 = scmp.ne.s32.totalorder %s35, %s38
      %p47 = scmp.eq.s32.totalorder %s30, 1
      %p48 = por %p46, %p47
      %p49 = scmp.ne.s32.totalorder %s38, %s39
      %p50 = scmp.eq.s32.totalorder %s30, 0
      %p51 = por %p49, %p50
      %p52 = scmp.ne.s32.totalorder %s38, %s39
      %p53 = scmp.eq.s32.totalorder %s31, 1
      %p54 = por %p52, %p53
      %p56 = scmp.ne.s32.totalorder %s39, %s55
      %p57 = scmp.eq.s32.totalorder %s31, 0
      %p58 = por %p56, %p57
      %s59 = ssub.s32 %s25, %s32
      %p60 = scmp.eq.s32.totalorder %s59, 0
      %s62 = sadd.s32 %s61, 1
      %s63 = scalar_select %p60, %s61, %s62
      %p66 = pneg %p60
      %p67 = scmp.eq.s32.totalorder %s25, 1
      %p68 = por %p66, %p67
      %p69 = scmp.ne.s32.totalorder %s61, %s64
      %p70 = scmp.eq.s32.totalorder %s25, 0
      %p71 = por %p69, %p70
      %p72 = scmp.ne.s32.totalorder %s61, %s64
      %p73 = scmp.eq.s32.totalorder %s30, 1
      %p74 = por %p72, %p73
      %p75 = scmp.ne.s32.totalorder %s64, %s65
      %p76 = scmp.eq.s32.totalorder %s30, 0
      %p77 = por %p75, %p76
      %p78 = scmp.ne.s32.totalorder %s64, %s65
      %p79 = scmp.eq.s32.totalorder %s31, 1
      %p80 = por %p78, %p79
      %p82 = scmp.ne.s32.totalorder %s65, %s81
      %p83 = scmp.eq.s32.totalorder %s31, 0
      %p84 = por %p82, %p83
      %s86 = sadd.s32 %s85, 1
      %p89 = scmp.eq.s32.totalorder %s25, 1
      %p90 = scmp.ne.s32.totalorder %s85, %s87
      %p91 = scmp.eq.s32.totalorder %s25, 0
      %p92 = por %p90, %p91
      %p93 = scmp.ne.s32.totalorder %s85, %s87
      %p94 = scmp.eq.s32.totalorder %s30, 1
      %p95 = por %p93, %p94
      %p96 = scmp.ne.s32.totalorder %s87, %s88
      %p97 = scmp.eq.s32.totalorder %s30, 0
      %p98 = por %p96, %p97
      %p99 = scmp.ne.s32.totalorder %s87, %s88
      %p100 = scmp.eq.s32.totalorder %s31, 1
      %p101 = por %p99, %p100
      %p103 = scmp.ne.s32.totalorder %s88, %s102
      %p104 = scmp.eq.s32.totalorder %s31, 0
      %p105 = por %p103, %p104
      %s107 = sadd.s32 %s106, 1
      %p110 = scmp.eq.s32.totalorder %s25, 1
      %p111 = scmp.ne.s32.totalorder %s106, %s108
      %p112 = scmp.eq.s32.totalorder %s25, 0
      %p113 = por %p111, %p112
      %p114 = scmp.ne.s32.totalorder %s106, %s108
      %p115 = scmp.eq.s32.totalorder %s30, 1
      %p116 = por %p114, %p115
      %p117 = scmp.ne.s32.totalorder %s108, %s109
      %p118 = scmp.eq.s32.totalorder %s30, 0
      %p119 = por %p117, %p118
      %p120 = scmp.ne.s32.totalorder %s108, %s109
      %p121 = scmp.eq.s32.totalorder %s31, 1
      %p122 = por %p120, %p121
      %p124 = scmp.ne.s32.totalorder %s109, %s123
      %p125 = scmp.eq.s32.totalorder %s31, 0
      %p126 = por %p124, %p125
      %s128 = sadd.s32 %s127, 1
      %p131 = scmp.eq.s32.totalorder %s25, 1
      %p132 = scmp.ne.s32.totalorder %s127, %s129
      %p133 = scmp.eq.s32.totalorder %s25, 0
      %p134 = por %p132, %p133
      %p135 = scmp.ne.s32.totalorder %s127, %s129
      %p136 = scmp.eq.s32.totalorder %s30, 1
      %p137 = por %p135, %p136
      %p138 = scmp.ne.s32.totalorder %s129, %s130
      %p139 = scmp.eq.s32.totalorder %s30, 0
      %p140 = por %p138, %p139
      %p141 = scmp.ne.s32.totalorder %s129, %s130
      %p142 = scmp.eq.s32.totalorder %s31, 1
      %p143 = por %p141, %p142
      %p145 = scmp.ne.s32.totalorder %s130, %s144
      %p146 = scmp.eq.s32.totalorder %s31, 0
      %p147 = por %p145, %p146
      %s149 = sadd.s32 %s148, 1
      %p152 = scmp.eq.s32.totalorder %s25, 1
      %p153 = scmp.ne.s32.totalorder %s148, %s150
      %p154 = scmp.eq.s32.totalorder %s25, 0
      %p155 = por %p153, %p154
      %p156 = scmp.ne.s32.totalorder %s148, %s150
      %p157 = scmp.eq.s32.totalorder %s30, 1
      %p158 = por %p156, %p157
      %p159 = scmp.ne.s32.totalorder %s150, %s151
      %p160 = scmp.eq.s32.totalorder %s30, 0
      %p161 = por %p159, %p160
      %p162 = scmp.ne.s32.totalorder %s150, %s151
      %p163 = scmp.eq.s32.totalorder %s31, 1
      %p164 = por %p162, %p163
      %p166 = scmp.ne.s32.totalorder %s151, %s165
      %p167 = scmp.eq.s32.totalorder %s31, 0
      %p168 = por %p166, %p167
      %s170 = sadd.s32 %s169, 1
      %p173 = scmp.eq.s32.totalorder %s25, 1
      %p174 = scmp.ne.s32.totalorder %s169, %s171
      %p175 = scmp.eq.s32.totalorder %s25, 0
      %p176 = por %p174, %p175
      %p177 = scmp.ne.s32.totalorder %s169, %s171
      %p178 = scmp.eq.s32.totalorder %s30, 1
      %p179 = por %p177, %p178
      %p180 = scmp.ne.s32.totalorder %s171, %s172
      %p181 = scmp.eq.s32.totalorder %s30, 0
      %p182 = por %p180, %p181
      %p183 = scmp.ne.s32.totalorder %s171, %s172
      %p184 = scmp.eq.s32.totalorder %s31, 1
      %p185 = por %p183, %p184
      %p187 = scmp.ne.s32.totalorder %s172, %s186
      %p188 = scmp.eq.s32.totalorder %s31, 0
      %p189 = por %p187, %p188
      %s191 = sadd.s32 %s190, 1
      %p194 = scmp.eq.s32.totalorder %s25, 1
      %p195 = scmp.ne.s32.totalorder %s190, %s192
      %p196 = scmp.eq.s32.totalorder %s25, 0
      %p197 = por %p195, %p196
      %p198 = scmp.ne.s32.totalorder %s190, %s192
      %p199 = scmp.eq.s32.totalorder %s30, 1
      %p200 = por %p198, %p199
      %p201 = scmp.ne.s32.totalorder %s192, %s193
      %p202 = scmp.eq.s32.totalorder %s30, 0
      %p203 = por %p201, %p202
      %p204 = scmp.ne.s32.totalorder %s192, %s193
      %p205 = scmp.eq.s32.totalorder %s31, 1
      %p206 = por %p204, %p205
      %p208 = scmp.ne.s32.totalorder %s193, %s207
      %p209 = scmp.eq.s32.totalorder %s31, 0
      %p210 = por %p208, %p209
      %s212 = sadd.s32 %s211, 1
      %p215 = scmp.eq.s32.totalorder %s25, 1
      %p216 = scmp.ne.s32.totalorder %s211, %s213
      %p217 = scmp.eq.s32.totalorder %s25, 0
      %p218 = por %p216, %p217
      %p219 = scmp.ne.s32.totalorder %s211, %s213
      %p220 = scmp.eq.s32.totalorder %s30, 1
      %p221 = por %p219, %p220
      %p222 = scmp.ne.s32.totalorder %s213, %s214
      %p223 = scmp.eq.s32.totalorder %s30, 0
      %p224 = por %p222, %p223
      %p225 = scmp.ne.s32.totalorder %s213, %s214
      %p226 = scmp.eq.s32.totalorder %s31, 1
      %p227 = por %p225, %p226
      %p229 = scmp.ne.s32.totalorder %s214, %s228
      %p230 = scmp.eq.s32.totalorder %s31, 0
      %p231 = por %p229, %p230
      %s233 = sadd.s32 %s232, 1
      %p236 = scmp.eq.s32.totalorder %s25, 1
      %p237 = scmp.ne.s32.totalorder %s232, %s234
      %p238 = scmp.eq.s32.totalorder %s25, 0
      %p239 = por %p237, %p238
      %p240 = scmp.ne.s32.totalorder %s232, %s234
      %p241 = scmp.eq.s32.totalorder %s30, 1
      %p242 = por %p240, %p241
      %p243 = scmp.ne.s32.totalorder %s234, %s235
      %p244 = scmp.eq.s32.totalorder %s30, 0
      %p245 = por %p243, %p244
      %p246 = scmp.ne.s32.totalorder %s234, %s235
      %p247 = scmp.eq.s32.totalorder %s31, 1
      %p248 = por %p246, %p247
      %p250 = scmp.ne.s32.totalorder %s235, %s249
      %p251 = scmp.eq.s32.totalorder %s31, 0
      %p252 = por %p250, %p251
      %s254 = sadd.s32 %s253, 1
      %p257 = scmp.eq.s32.totalorder %s25, 1
      %p258 = scmp.ne.s32.totalorder %s253, %s255
      %p259 = scmp.eq.s32.totalorder %s25, 0
      %p260 = por %p258, %p259
      %p261 = scmp.ne.s32.totalorder %s253, %s255
      %p262 = scmp.eq.s32.totalorder %s30, 1
      %p263 = por %p261, %p262
      %p264 = scmp.ne.s32.totalorder %s255, %s256
      %p265 = scmp.eq.s32.totalorder %s30, 0
      %p266 = por %p264, %p265
      %p267 = scmp.ne.s32.totalorder %s255, %s256
      %p268 = scmp.eq.s32.totalorder %s31, 1
      %p269 = por %p267, %p268
      %p271 = scmp.ne.s32.totalorder %s256, %s270
      %p272 = scmp.eq.s32.totalorder %s31, 0
      %p273 = por %p271, %p272
      %s275 = sadd.s32 %s274, 1
      %p278 = scmp.eq.s32.totalorder %s25, 1
      %p279 = scmp.ne.s32.totalorder %s274, %s276
      %p280 = scmp.eq.s32.totalorder %s25, 0
      %p281 = por %p279, %p280
      %p282 = scmp.ne.s32.totalorder %s274, %s276
      %p283 = scmp.eq.s32.totalorder %s30, 1
      %p284 = por %p282, %p283
      %p285 = scmp.ne.s32.totalorder %s276, %s277
      %p286 = scmp.eq.s32.totalorder %s30, 0
      %p287 = por %p285, %p286
      %p288 = scmp.ne.s32.totalorder %s276, %s277
      %p289 = scmp.eq.s32.totalorder %s31, 1
      %p290 = por %p288, %p289
      %p292 = scmp.ne.s32.totalorder %s277, %s291
      %p293 = scmp.eq.s32.totalorder %s31, 0
      %p294 = por %p292, %p293
      %s295 = ssub.s32 %s25, %s32
      %p296 = scmp.eq.s32.totalorder %s295, 0
      %s298 = sadd.s32 %s297, 1
      %s299 = scalar_select %p296, %s297, %s298
      %p302 = pneg %p296
      %p303 = scmp.eq.s32.totalorder %s25, 1
      %p304 = por %p302, %p303
      %p305 = scmp.ne.s32.totalorder %s297, %s300
      %p306 = scmp.eq.s32.totalorder %s25, 0
      %p307 = por %p305, %p306
      %p308 = scmp.ne.s32.totalorder %s297, %s300
      %p309 = scmp.eq.s32.totalorder %s30, 1
      %p310 = por %p308, %p309
      %p311 = scmp.ne.s32.totalorder %s300, %s301
      %p312 = scmp.eq.s32.totalorder %s30, 0
      %p313 = por %p311, %p312
      %p314 = scmp.ne.s32.totalorder %s300, %s301
      %p315 = scmp.eq.s32.totalorder %s31, 1
      %p316 = por %p314, %p315
      %p318 = scmp.ne.s32.totalorder %s301, %s317
      %p319 = scmp.eq.s32.totalorder %s31, 0
      %p320 = por %p318, %p319
      %p321 = scmp.le.s32.totalorder 1, %s25
      %p322 = scmp.lt.s32.totalorder %s25, 3
      %p323 = pnand %p321, %p322
      %p324 = pneg %p323
      // Predicated region
      $region9: #{tpu_custom_call.1} parent=5 // pred_check
        _
      $region10: #{tpu_custom_call.1} parent=5 // pred_check_branch
        %326 = sbr.rel (%p323) target = $region12
      $region11: #{tpu_custom_call.1} parent=5 // pred_region
        %s327 = ssub.s32 %s25, 1
        // Predicated region
        $region13: #{tpu_custom_call.1} parent=11 // pred_check
          %p328 = pneg %p98
        $region14: #{tpu_custom_call.1} parent=11 // pred_check_branch
          %330 = sbr.rel (%p328) target = $region16
        $region15: #{tpu_custom_call.1} parent=11 // pred_region
          %s332 = ssub.s32 512, 512
          %333 = vsyncadd [#allocation7], %s332
          %s334 = sshll.u32 [#allocation6], 4
          %s335 = int_to_ptr.vmem [resolvable:$true] %s334
          %340 = dma.hbm_to_vmem [thread:$0]  %s2, 512, %s335, [#allocation7], 128, 128, 8
        $region16: #{tpu_custom_call.1} parent=11 // pred_fallthru
          _
        // Predicated region
        $region17: #{tpu_custom_call.1} parent=11 // pred_check
          %p341 = pneg %p119
        $region18: #{tpu_custom_call.1} parent=11 // pred_check_branch
          %343 = sbr.rel (%p341) target = $region20
        $region19: #{tpu_custom_call.1} parent=11 // pred_region
          _
        $region20: #{tpu_custom_call.1} parent=11 // pred_fallthru
          _
        // Predicated region
        $region21: #{tpu_custom_call.1} parent=11 // pred_check
          %p344 = pneg %p140
        $region22: #{tpu_custom_call.1} parent=11 // pred_check_branch
          %346 = sbr.rel (%p344) target = $region24
        $region23: #{tpu_custom_call.1} parent=11 // pred_region
          _
        $region24: #{tpu_custom_call.1} parent=11 // pred_fallthru
          _
        // Predicated region
        $region25: #{tpu_custom_call.1} parent=11 // pred_check
          %p347 = pneg %p161
        $region26: #{tpu_custom_call.1} parent=11 // pred_check_branch
          %349 = sbr.rel (%p347) target = $region28
        $region27: #{tpu_custom_call.1} parent=11 // pred_region
          _
        $region28: #{tpu_custom_call.1} parent=11 // pred_fallthru
          _
        // Predicated region
        $region29: #{tpu_custom_call.1} parent=11 // pred_check
          %p350 = pneg %p182
        $region30: #{tpu_custom_call.1} parent=11 // pred_check_branch
          %352 = sbr.rel (%p350) target = $region32
        $region31: #{tpu_custom_call.1} parent=11 // pred_region
          _
        $region32: #{tpu_custom_call.1} parent=11 // pred_fallthru
          _
        // Predicated region
        $region33: #{tpu_custom_call.1} parent=11 // pred_check
          %p353 = pneg %p203
        $region34: #{tpu_custom_call.1} parent=11 // pred_check_branch
          %355 = sbr.rel (%p353) target = $region36
        $region35: #{tpu_custom_call.1} parent=11 // pred_region
          _
        $region36: #{tpu_custom_call.1} parent=11 // pred_fallthru
          _
        // Predicated region
        $region37: #{tpu_custom_call.1} parent=11 // pred_check
          %p356 = pneg %p224
        $region38: #{tpu_custom_call.1} parent=11 // pred_check_branch
          %358 = sbr.rel (%p356) target = $region40
        $region39: #{tpu_custom_call.1} parent=11 // pred_region
          _
        $region40: #{tpu_custom_call.1} parent=11 // pred_fallthru
          _
        // Predicated region
        $region41: #{tpu_custom_call.1} parent=11 // pred_check
          %p359 = pneg %p245
        $region42: #{tpu_custom_call.1} parent=11 // pred_check_branch
          %361 = sbr.rel (%p359) target = $region44
        $region43: #{tpu_custom_call.1} parent=11 // pred_region
          _
        $region44: #{tpu_custom_call.1} parent=11 // pred_fallthru
          _
        // Predicated region
        $region45: #{tpu_custom_call.1} parent=11 // pred_check
          %p362 = pneg %p266
        $region46: #{tpu_custom_call.1} parent=11 // pred_check_branch
          %364 = sbr.rel (%p362) target = $region48
        $region47: #{tpu_custom_call.1} parent=11 // pred_region
          _
        $region48: #{tpu_custom_call.1} parent=11 // pred_fallthru
          _
        // Predicated region
        $region49: #{tpu_custom_call.1} parent=11 // pred_check
          %p365 = pneg %p287
        $region50: #{tpu_custom_call.1} parent=11 // pred_check_branch
          %367 = sbr.rel (%p365) target = $region52
        $region51: #{tpu_custom_call.1} parent=11 // pred_region
          _
        $region52: #{tpu_custom_call.1} parent=11 // pred_fallthru
          _
      $region12: #{tpu_custom_call.1} parent=5 // pred_fallthru
        _
      %p368 = scmp.lt.s32.totalorder %s25, 2
      // Predicated region
      $region53: #{tpu_custom_call.1} parent=5 // pred_check
        %p369 = pneg %p368
      $region54: #{tpu_custom_call.1} parent=5 // pred_check_branch
        %371 = sbr.rel (%p369) target = $region56
      $region55: #{tpu_custom_call.1} parent=5 // pred_region
        // Predicated region
        $region57: #{tpu_custom_call.1} parent=55 // pred_check
          %p372 = pneg %p45
        $region58: #{tpu_custom_call.1} parent=55 // pred_check_branch
          %374 = sbr.rel (%p372) target = $region60
        $region59: #{tpu_custom_call.1} parent=55 // pred_region
          %s375 = sand.u32 %s35, 1
          %s376 = scalar_lea.sflag [#allocation3], %s375
          %s377 = sand.u32 %s35, 1
          %s378 = smul.addr %s377, 16
          %s379 = scalar_lea.vmem [#allocation2], %s378
          %s380 = smul.u32 2, %s25
          %s382 = ssub.s32 256, 256
          %383 = vsyncadd %s376, %s382
          %s384 = smul.addr %s380, 128
          %s385 = scalar_lea.hbm %s0, %s384
          %s386 = sshll.u32 %s379, 4
          %s387 = int_to_ptr.vmem [resolvable:$true] %s386
          %392 = dma.hbm_to_vmem [thread:$0]  %s385, 256, %s387, %s376, 128, 128, 8
        $region60: #{tpu_custom_call.1} parent=55 // pred_fallthru
          _
        // Predicated region
        $region61: #{tpu_custom_call.1} parent=55 // pred_check
          %p393 = pneg %p71
        $region62: #{tpu_custom_call.1} parent=55 // pred_check_branch
          %395 = sbr.rel (%p393) target = $region64
        $region63: #{tpu_custom_call.1} parent=55 // pred_region
          %s396 = sand.u32 %s61, 1
          %s397 = sand.u32 %s61, 1
          %s398 = smul.addr %s397, 80
          %s399 = scalar_lea.vmem [#allocation5], %s398
          %s400 = smul.u32 2, %s25
          %s401 = smul.addr %s400, 8
          %s402 = scalar_lea.vmem %s1, %s401
          // Predicated region
          $region65: #{tpu_custom_call.1} parent=63 // pred_check
            _
          $region66: #{tpu_custom_call.1} parent=63 // pred_check_branch
            %404 = sbr.rel (0) target = $region68
          $region67: #{tpu_custom_call.1} parent=63 // pred_region
            // Predicated region
            $region69: #{tpu_custom_call.1} parent=67 // pred_check
              _
            $region70: #{tpu_custom_call.1} parent=67 // pred_check_branch
              %406 = sbr.rel (0) target = $region72
            $region71: #{tpu_custom_call.1} parent=67 // pred_region
              // Predicated region
              $region84: #{tpu_custom_call.1} parent=71 // pred_check
                _
              $region85: #{tpu_custom_call.1} parent=71 // pred_check_branch
                %439 = sbr.rel (0) target = $region87
              $region86: #{tpu_custom_call.1} parent=71 // pred_region
                loop: start=0, step=1, limit=1
                $region88: #{tpu_custom_call.1} parent=86 // loop_pre_header
                  _
                $region89: #{tpu_custom_call.1} parent=86 // loop_header
                  %s441 = sphi 0, %s445
                  %p442 = scmp.ge.s32.totalorder %s441, 1
                  %s446 = sphi %s402, %s402
                  %s447 = sphi %s399, %s399
                $region90: #{tpu_custom_call.1} parent=86 // loop_header_branch
                  %444 = sbr.rel (%p442) target = $region94
                $region91: #{tpu_custom_call.1} parent=86 // loop_body
                  %v448 = vld [vmem:[%s446] sm:$0xff]
                  %449 = vst [vmem:[%s447] sm:$0xff] %v448
                  %v450 = vld [vmem:[%s446 + $0x8] sm:$0xff]
                  %451 = vst [vmem:[%s447 + $0x8] sm:$0xff] %v450
                  %v452 = vld [vmem:[%s446 + $0x20] sm:$0xff]
                  %453 = vst [vmem:[%s447 + $0x10] sm:$0xff] %v452
                  %v454 = vld [vmem:[%s446 + $0x28] sm:$0xff]
                  %455 = vst [vmem:[%s447 + $0x18] sm:$0xff] %v454
                  %v456 = vld [vmem:[%s446 + $0x40] sm:$0xff]
                  %457 = vst [vmem:[%s447 + $0x20] sm:$0xff] %v456
                  %v458 = vld [vmem:[%s446 + $0x48] sm:$0xff]
                  %459 = vst [vmem:[%s447 + $0x28] sm:$0xff] %v458
                  %v460 = vld [vmem:[%s446 + $0x60] sm:$0xff]
                  %461 = vst [vmem:[%s447 + $0x30] sm:$0xff] %v460
                  %v462 = vld [vmem:[%s446 + $0x68] sm:$0xff]
                  %463 = vst [vmem:[%s447 + $0x38] sm:$0xff] %v462
                  %v464 = vld [vmem:[%s446 + $0x80] sm:$0xff]
                  %465 = vst [vmem:[%s447 + $0x40] sm:$0xff] %v464
                  %v466 = vld [vmem:[%s446 + $0x88] sm:$0xff]
                  %467 = vst [vmem:[%s447 + $0x48] sm:$0xff] %v466
                $region92: #{tpu_custom_call.1} parent=86 // loop_footer
                  %s445 = sadd.s32 1, %s441
                $region93: #{tpu_custom_call.1} parent=86 // loop_footer_branch
                  %440 = sbr.rel target = $region89
                $region94: #{tpu_custom_call.1} parent=86 // loop_exit
                  _
              $region87: #{tpu_custom_call.1} parent=71 // pred_fallthru
                _
              // Predicated region
              $region95: #{tpu_custom_call.1} parent=71 // pred_check
                _
              $region96: #{tpu_custom_call.1} parent=71 // pred_check_branch
                %469 = sbr.rel target = $region98
              $region97: #{tpu_custom_call.1} parent=71 // pred_region
                _
              $region98: #{tpu_custom_call.1} parent=71 // pred_fallthru
                _
            $region72: #{tpu_custom_call.1} parent=67 // pred_fallthru
              _
            // Predicated region
            $region73: #{tpu_custom_call.1} parent=67 // pred_check
              _
            $region74: #{tpu_custom_call.1} parent=67 // pred_check_branch
              %408 = sbr.rel target = $region76
            $region75: #{tpu_custom_call.1} parent=67 // pred_region
              loop: start=0, step=1, limit=1
              $region77: #{tpu_custom_call.1} parent=75 // loop_pre_header
                _
              $region78: #{tpu_custom_call.1} parent=75 // loop_header
                %s411 = sphi 0, %s415
                %p412 = scmp.ge.s32.totalorder %s411, 1
                %s416 = sphi %s402, %s402
                %s417 = sphi %s399, %s399
              $region79: #{tpu_custom_call.1} parent=75 // loop_header_branch
                %414 = sbr.rel (%p412) target = $region83
              $region80: #{tpu_custom_call.1} parent=75 // loop_body
                %v418 = vld [vmem:[%s416] sm:$0xff]
                %419 = vst [vmem:[%s417] sm:$0xff] %v418
                %v420 = vld [vmem:[%s416 + $0x8] sm:$0xff]
                %421 = vst [vmem:[%s417 + $0x8] sm:$0xff] %v420
                %v422 = vld [vmem:[%s416 + $0x20] sm:$0xff]
                %423 = vst [vmem:[%s417 + $0x10] sm:$0xff] %v422
                %v424 = vld [vmem:[%s416 + $0x28] sm:$0xff]
                %425 = vst [vmem:[%s417 + $0x18] sm:$0xff] %v424
                %v426 = vld [vmem:[%s416 + $0x40] sm:$0xff]
                %427 = vst [vmem:[%s417 + $0x20] sm:$0xff] %v426
                %v428 = vld [vmem:[%s416 + $0x48] sm:$0xff]
                %429 = vst [vmem:[%s417 + $0x28] sm:$0xff] %v428
                %v430 = vld [vmem:[%s416 + $0x60] sm:$0xff]
                %431 = vst [vmem:[%s417 + $0x30] sm:$0xff] %v430
                %v432 = vld [vmem:[%s416 + $0x68] sm:$0xff]
                %433 = vst [vmem:[%s417 + $0x38] sm:$0xff] %v432
                %v434 = vld [vmem:[%s416 + $0x80] sm:$0xff]
                %435 = vst [vmem:[%s417 + $0x40] sm:$0xff] %v434
                %v436 = vld [vmem:[%s416 + $0x88] sm:$0xff]
                %437 = vst [vmem:[%s417 + $0x48] sm:$0xff] %v436
              $region81: #{tpu_custom_call.1} parent=75 // loop_footer
                %s415 = sadd.s32 1, %s411
              $region82: #{tpu_custom_call.1} parent=75 // loop_footer_branch
                %410 = sbr.rel target = $region78
              $region83: #{tpu_custom_call.1} parent=75 // loop_exit
                _
            $region76: #{tpu_custom_call.1} parent=67 // pred_fallthru
              _
          $region68: #{tpu_custom_call.1} parent=63 // pred_fallthru
            _
          %470 = vnop
        $region64: #{tpu_custom_call.1} parent=55 // pred_fallthru
          _
      $region56: #{tpu_custom_call.1} parent=5 // pred_fallthru
        _
      %p471 = scmp.le.s32.totalorder 1, %s25
      %p472 = scmp.lt.s32.totalorder %s25, 3
      %p473 = pnand %p471, %p472
      %p474 = pneg %p473
      // Predicated region
      $region99: #{tpu_custom_call.1} parent=5 // pred_check
        _
      $region100: #{tpu_custom_call.1} parent=5 // pred_check_branch
        %476 = sbr.rel (%p473) target = $region102
      $region101: #{tpu_custom_call.1} parent=5 // pred_region
        %s477 = ssub.s32 %s25, 1
        %s478 = sand.u32 %s38, 1
        %s479 = scalar_lea.sflag [#allocation3], %s478
        %s480 = sand.u32 %s38, 1
        %s481 = smul.addr %s480, 16
        %s482 = scalar_lea.vmem [#allocation2], %s481
        // Predicated region
        $region103: #{tpu_custom_call.1} parent=101 // pred_check
          %p483 = pneg %p51
        $region104: #{tpu_custom_call.1} parent=101 // pred_check_branch
          %485 = sbr.rel (%p483) target = $region106
        $region105: #{tpu_custom_call.1} parent=101 // pred_region
          %486 = dma.done %s479, 256
        $region106: #{tpu_custom_call.1} parent=101 // pred_fallthru
          _
        %s487 = sand.u32 %s64, 1
        %s488 = sand.u32 %s64, 1
        %s489 = smul.addr %s488, 80
        %s490 = scalar_lea.vmem [#allocation5], %s489
        // Predicated region
        $region107: #{tpu_custom_call.1} parent=101 // pred_check
          %p491 = pneg %p77
        $region108: #{tpu_custom_call.1} parent=101 // pred_check_branch
          %493 = sbr.rel (%p491) target = $region110
        $region109: #{tpu_custom_call.1} parent=101 // pred_region
          _
        $region110: #{tpu_custom_call.1} parent=101 // pred_fallthru
          _
        // Predicated region
        $region111: #{tpu_custom_call.1} parent=101 // pred_check
          %p494 = pneg %p98
        $region112: #{tpu_custom_call.1} parent=101 // pred_check_branch
          %496 = sbr.rel (%p494) target = $region114
        $region113: #{tpu_custom_call.1} parent=101 // pred_region
          %497 = dma.done [#allocation7], 512
        $region114: #{tpu_custom_call.1} parent=101 // pred_fallthru
          _
        %s498 = sand.u32 %s38, 1
        %s499 = scalar_lea.sflag [#allocation3], %s498
        %s500 = sand.u32 %s38, 1
        %s501 = smul.addr %s500, 16
        %s502 = scalar_lea.vmem [#allocation2], %s501
        %p503 = pneg %p51
        %p504 = pneg %p48
        %s505 = sand.u32 %s64, 1
        %s506 = sand.u32 %s64, 1
        %s507 = smul.addr %s506, 80
        %s508 = scalar_lea.vmem [#allocation5], %s507
        %p509 = pneg %p77
        %p510 = pneg %p74
        %p511 = pneg %p98
        %p512 = pneg %p95
        %p513 = pneg %p119
        %p514 = pneg %p116
        %p515 = pneg %p140
        %p516 = pneg %p137
        %p517 = pneg %p161
        %p518 = pneg %p158
        %p519 = pneg %p182
        %p520 = pneg %p179
        %p521 = pneg %p203
        %p522 = pneg %p200
        %p523 = pneg %p224
        %p524 = pneg %p221
        %p525 = pneg %p245
        %p526 = pneg %p242
        %p527 = pneg %p266
        %p528 = pneg %p263
        %p529 = pneg %p287
        %p530 = pneg %p284
        %p531 = pneg %p313
        %p532 = pneg %p310
        %s533 = sand.u32 %s300, 1
        %s534 = scalar_lea.sflag [#allocation4], %s533
        %s535 = sand.u32 %s300, 1
        %s536 = smul.addr %s535, 16
        %s537 = scalar_lea.vmem [#allocation8], %s536
        %s538 = smul.u32 2, %s30
        %s539 = smul.u32 2, %s30
        %s540 = smul.u32 2, %s30
        %v541 = vld [vmem:[%s482] sm:$0xff]
        %v542 = vld [vmem:[%s482 + $0x8] sm:$0xff]
        %v543 = vld [vmem:[#allocation6] sm:$0xff]
        %v544 = vld [vmem:[#allocation6 + $0x8] sm:$0xff]
        %v545 = vld [vmem:[#allocation6 + $0x10] sm:$0xff]
        %v546 = vld [vmem:[#allocation6 + $0x18] sm:$0xff]
        %vm547 = vcmask 261120
        %v549 = vsel %vm547, %v541, 0
        %v552 = vsel %vm547, %v542, 0
        %554 = vmatprep.subr.mxu0 0.0
        %555 = vmatpush1.msra.mxu0 %v543
        %556 = vmatprep.subr.mxu0 0.0
        %557 = vmatpush1.msra.mxu0 %v544
        %558 = vmatprep.subr.mxu0 0.0
        %559 = vmatpush1.msra.mxu0 %v545
        %560 = vmatprep.subr.mxu0 0.0
        %561 = vmatpush1.msra.mxu0 %v546
        %562 = vmatprep.subr.mxu0 0.0
        %563 = vmatpush1.msra.mxu0 0.0
        %564 = vmatprep.subr.mxu0 0.0
        %565 = vmatpush1.msra.mxu0 0.0
        %566 = vmatprep.subr.mxu0 0.0
        %567 = vmatpush1.msra.mxu0 0.0
        %568 = vmatprep.subr.mxu0 0.0
        %569 = vmatpush1.msra.mxu0 0.0
        %570 = vmatprep.subr.mxu0 0.0
        %571 = vmatpush1.msra.mxu0 0.0
        %572 = vmatprep.subr.mxu0 0.0
        %573 = vmatpush1.msra.mxu0 0.0
        %574 = vmatprep.subr.mxu0 0.0
        %575 = vmatpush1.msra.mxu0 0.0
        %576 = vmatprep.subr.mxu0 0.0
        %577 = vmatpush1.msra.mxu0 0.0
        %578 = vmatprep.subr.mxu0 0.0
        %579 = vmatpush1.msra.mxu0 0.0
        %580 = vmatprep.subr.mxu0 0.0
        %581 = vmatpush1.msra.mxu0 0.0
        %582 = vmatprep.subr.mxu0 0.0
        %583 = vmatpush1.msra.mxu0 0.0
        %584 = vmatprep.subr.mxu0 0.0
        %585 = vmatpush1.msra.mxu0 0.0
        %586 = vmatprep.subr.mxu0 0.0
        %587 = vmatpush1.msra.mxu0 0.0
        %588 = vmatprep.subr.mxu0 0.0
        %589 = vmatpush1.msra.mxu0 0.0
        %590 = vmatprep.subr.mxu0 0.0
        %591 = vmatpush1.msra.mxu0 0.0
        %592 = vmatprep.subr.mxu0 0.0
        %593 = vmatpush1.msra.mxu0 0.0
        %594 = vmatprep.subr.mxu0 0.0
        %595 = vmatpush1.msra.mxu0 0.0
        %596 = vmatprep.subr.mxu0 0.0
        %597 = vmatpush1.msra.mxu0 0.0
        %598 = vmatprep.subr.mxu0 0.0
        %599 = vmatpush1.msra.mxu0 0.0
        %600 = vmatprep.subr.mxu0 0.0
        %601 = vmatpush1.msra.mxu0 0.0
        %602 = vmatprep.subr.mxu0 0.0
        %603 = vmatpush1.msra.mxu0 0.0
        %604 = vmatprep.subr.mxu0 0.0
        %605 = vmatpush1.msra.mxu0 0.0
        %606 = vmatprep.subr.mxu0 0.0
        %607 = vmatpush1.msra.mxu0 0.0
        %608 = vmatprep.subr.mxu0 0.0
        %609 = vmatpush1.msra.mxu0 0.0
        %610 = vmatprep.subr.mxu0 0.0
        %611 = vmatpush1.msra.mxu0 0.0
        %612 = vmatprep.subr.mxu0 0.0
        %613 = vmatpush1.msra.mxu0 0.0
        %614 = vmatprep.subr.mxu0 0.0
        %615 = vmatpush1.msra.mxu0 0.0
        %616 = vmatprep.subr.mxu0 0.0
        %617 = vmatpush1.msra.mxu0 0.0
        %618 = vmatprep.mubr.f32.mxu0 0.0
        %619 = vmatmul.mubr.f32.gmra.mrb[0].mxu0 %v549
        %v620 = vpop.f32.mrb[0].mxu0
        %v621 = vadd.f32 0.0, %v620
        %v622 = vpop.f32.mrb[0].mxu0
        %623 = vmatprep.mubr.f32.mxu0 0.0
        %624 = vmatmul.mubr.f32.gmra.mrb[0].mxu0 %v552
        %v625 = vpop.f32.mrb[0].mxu0
        %v626 = vadd.f32 0.0, %v625
        %v627 = vpop.f32.mrb[0].mxu0
        %628 = vdwg.mxu0
        %v629 = vld [vmem:[%s490] sm:$0xff]
        %v630 = vld [vmem:[%s490 + $0x8] sm:$0xff]
        %v631 = vld [vmem:[%s490 + $0x10] sm:$0xff]
        %v632 = vld [vmem:[%s490 + $0x18] sm:$0xff]
        %v633 = vld [vmem:[%s490 + $0x20] sm:$0xff]
        %v634 = vld [vmem:[%s490 + $0x28] sm:$0xff]
        %v635 = vld [vmem:[%s490 + $0x30] sm:$0xff]
        %v636 = vld [vmem:[%s490 + $0x38] sm:$0xff]
        %v637 = vld [vmem:[%s490 + $0x40] sm:$0xff]
        %v638 = vld [vmem:[%s490 + $0x48] sm:$0xff]
        %v639 = vld [vmem:[%s3] sm:$0xff]
        %v640 = vld [vmem:[%s3 + $0x8] sm:$0xff]
        %v641 = vld [vmem:[%s3 + $0x10] sm:$0xff]
        %v642 = vld [vmem:[%s3 + $0x18] sm:$0xff]
        %v643 = vld [vmem:[%s3 + $0x20] sm:$0x3]
        %vm644 = vcmask 277504
        %v646 = vsel %vm644, %v629, 0
        %v649 = vsel %vm644, %v630, 0
        %v652 = vsel %vm644, %v631, 0
        %v655 = vsel %vm644, %v632, 0
        %v658 = vsel %vm644, %v633, 0
        %v661 = vsel %vm644, %v634, 0
        %v664 = vsel %vm644, %v635, 0
        %v667 = vsel %vm644, %v636, 0
        %v670 = vsel %vm644, %v637, 0
        %v673 = vsel %vm644, %v638, 0
        %vm675 = vcmask 1041408
        %v677 = vsel %vm675, %v643, 0
        %679 = vmatprep.subr.mxu0 0.0
        %680 = vmatpush1.msra.mxu0 %v639
        %681 = vmatprep.subr.mxu0 0.0
        %682 = vmatpush1.msra.mxu0 %v640
        %683 = vmatprep.subr.mxu0 0.0
        %684 = vmatpush1.msra.mxu0 %v641
        %685 = vmatprep.subr.mxu0 0.0
        %686 = vmatpush1.msra.mxu0 %v642
        %687 = vmatprep.subr.mxu0 0.0
        %688 = vmatpush1.msra.mxu0 %v677
        %689 = vmatprep.subr.mxu0 0.0
        %690 = vmatpush1.msra.mxu0 0.0
        %691 = vmatprep.subr.mxu0 0.0
        %692 = vmatpush1.msra.mxu0 0.0
        %693 = vmatprep.subr.mxu0 0.0
        %694 = vmatpush1.msra.mxu0 0.0
        %695 = vmatprep.subr.mxu0 0.0
        %696 = vmatpush1.msra.mxu0 0.0
        %697 = vmatprep.subr.mxu0 0.0
        %698 = vmatpush1.msra.mxu0 0.0
        %699 = vmatprep.subr.mxu0 0.0
        %700 = vmatpush1.msra.mxu0 0.0
        %701 = vmatprep.subr.mxu0 0.0
        %702 = vmatpush1.msra.mxu0 0.0
        %703 = vmatprep.subr.mxu0 0.0
        %704 = vmatpush1.msra.mxu0 0.0
        %705 = vmatprep.subr.mxu0 0.0
        %706 = vmatpush1.msra.mxu0 0.0
        %707 = vmatprep.subr.mxu0 0.0
        %708 = vmatpush1.msra.mxu0 0.0
        %709 = vmatprep.subr.mxu0 0.0
        %710 = vmatpush1.msra.mxu0 0.0
        %711 = vmatprep.subr.mxu0 0.0
        %712 = vmatpush1.msra.mxu0 0.0
        %713 = vmatprep.subr.mxu0 0.0
        %714 = vmatpush1.msra.mxu0 0.0
        %715 = vmatprep.subr.mxu0 0.0
        %716 = vmatpush1.msra.mxu0 0.0
        %717 = vmatprep.subr.mxu0 0.0
        %718 = vmatpush1.msra.mxu0 0.0
        %719 = vmatprep.subr.mxu0 0.0
        %720 = vmatpush1.msra.mxu0 0.0
        %721 = vmatprep.subr.mxu0 0.0
        %722 = vmatpush1.msra.mxu0 0.0
        %723 = vmatprep.subr.mxu0 0.0
        %724 = vmatpush1.msra.mxu0 0.0
        %725 = vmatprep.subr.mxu0 0.0
        %726 = vmatpush1.msra.mxu0 0.0
        %727 = vmatprep.subr.mxu0 0.0
        %728 = vmatpush1.msra.mxu0 0.0
        %729 = vmatprep.subr.mxu0 0.0
        %730 = vmatpush1.msra.mxu0 0.0
        %731 = vmatprep.subr.mxu0 0.0
        %732 = vmatpush1.msra.mxu0 0.0
        %733 = vmatprep.subr.mxu0 0.0
        %734 = vmatpush1.msra.mxu0 0.0
        %735 = vmatprep.subr.mxu0 0.0
        %736 = vmatpush1.msra.mxu0 0.0
        %737 = vmatprep.subr.mxu0 0.0
        %738 = vmatpush1.msra.mxu0 0.0
        %739 = vmatprep.subr.mxu0 0.0
        %740 = vmatpush1.msra.mxu0 0.0
        %741 = vmatprep.subr.mxu0 0.0
        %742 = vmatpush1.msra.mxu0 0.0
        %743 = vmatprep.mubr.f32.mxu0 0.0
        %744 = vmatmul.mubr.f32.gmra.mrb[0].mxu0 %v646
        %v745 = vpop.f32.mrb[0].mxu0
        %v746 = vadd.f32 0.0, %v745
        %v747 = vpop.f32.mrb[0].mxu0
        %748 = vmatprep.mubr.f32.mxu0 0.0
        %749 = vmatmul.mubr.f32.gmra.mrb[0].mxu0 %v649
        %v750 = vpop.f32.mrb[0].mxu0
        %v751 = vadd.f32 0.0, %v750
        %v752 = vpop.f32.mrb[0].mxu0
        %753 = vmatprep.mubr.f32.mxu0 0.0
        %754 = vmatmul.mubr.f32.gmra.mrb[0].mxu0 %v652
        %v755 = vpop.f32.mrb[0].mxu0
        %v756 = vadd.f32 0.0, %v755
        %v757 = vpop.f32.mrb[0].mxu0
        %758 = vmatprep.mubr.f32.mxu0 0.0
        %759 = vmatmul.mubr.f32.gmra.mrb[0].mxu0 %v655
        %v760 = vpop.f32.mrb[0].mxu0
        %v761 = vadd.f32 0.0, %v760
        %v762 = vpop.f32.mrb[0].mxu0
        %763 = vmatprep.mubr.f32.mxu0 0.0
        %764 = vmatmul.mubr.f32.gmra.mrb[0].mxu0 %v658
        %v765 = vpop.f32.mrb[0].mxu0
        %v766 = vadd.f32 0.0, %v765
        %v767 = vpop.f32.mrb[0].mxu0
        %768 = vmatprep.mubr.f32.mxu0 0.0
        %769 = vmatmul.mubr.f32.gmra.mrb[0].mxu0 %v661
        %v770 = vpop.f32.mrb[0].mxu0
        %v771 = vadd.f32 0.0, %v770
        %v772 = vpop.f32.mrb[0].mxu0
        %773 = vmatprep.mubr.f32.mxu0 0.0
        %774 = vmatmul.mubr.f32.gmra.mrb[0].mxu0 %v664
        %v775 = vpop.f32.mrb[0].mxu0
        %v776 = vadd.f32 0.0, %v775
        %v777 = vpop.f32.mrb[0].mxu0
        %778 = vmatprep.mubr.f32.mxu0 0.0
        %779 = vmatmul.mubr.f32.gmra.mrb[0].mxu0 %v667
        %v780 = vpop.f32.mrb[0].mxu0
        %v781 = vadd.f32 0.0, %v780
        %v782 = vpop.f32.mrb[0].mxu0
        %783 = vmatprep.mubr.f32.mxu0 0.0
        %784 = vmatmul.mubr.f32.gmra.mrb[0].mxu0 %v670
        %v785 = vpop.f32.mrb[0].mxu0
        %v786 = vadd.f32 0.0, %v785
        %v787 = vpop.f32.mrb[0].mxu0
        %788 = vmatprep.mubr.f32.mxu0 0.0
        %789 = vmatmul.mubr.f32.gmra.mrb[0].mxu0 %v673
        %v790 = vpop.f32.mrb[0].mxu0
        %v791 = vadd.f32 0.0, %v790
        %v792 = vpop.f32.mrb[0].mxu0
        %793 = vdwg.mxu0
        %v794 = vadd.f32 %v746, %v621
        %v795 = vadd.f32 %v751, %v626
        %v796 = vadd.f32 %v756, %v621
        %v797 = vadd.f32 %v761, %v626
        %v798 = vadd.f32 %v766, %v621
        %v799 = vadd.f32 %v771, %v626
        %v800 = vadd.f32 %v776, %v621
        %v801 = vadd.f32 %v781, %v626
        %v802 = vadd.f32 %v786, %v621
        %v803 = vadd.f32 %v791, %v626
        %v804 = vld [vmem:[%s4] sm:$0x1]
        %v806 = vlaneseq
        %v807 = vshrl.u32 %v806, 7
        %v808 = vsub.s32 0, %v807
        %v809 = vrot.slane %v804, %v808
        %v811 = vadd.f32 %v794, %v809
        %v812 = vadd.f32 %v795, %v809
        %v813 = vadd.f32 %v796, %v809
        %v814 = vadd.f32 %v797, %v809
        %v815 = vadd.f32 %v798, %v809
        %v816 = vadd.f32 %v799, %v809
        %v817 = vadd.f32 %v800, %v809
        %v818 = vadd.f32 %v801, %v809
        %v819 = vadd.f32 %v802, %v809
        %v820 = vadd.f32 %v803, %v809
        %v821 = vxor.u32 %v811, 2147483648
        %v822 = vxor.u32 %v812, 2147483648
        %v823 = vxor.u32 %v813, 2147483648
        %v824 = vxor.u32 %v814, 2147483648
        %v825 = vxor.u32 %v815, 2147483648
        %v826 = vxor.u32 %v816, 2147483648
        %v827 = vxor.u32 %v817, 2147483648
        %v828 = vxor.u32 %v818, 2147483648
        %v829 = vxor.u32 %v819, 2147483648
        %v830 = vxor.u32 %v820, 2147483648
        %v831 = vmul.f32 %v821, 1.442695
        %v832 = vpow.pop %v831
        %v833 = vmul.f32 %v822, 1.442695
        %v834 = vpow.pop %v833
        %v835 = vmul.f32 %v823, 1.442695
        %v836 = vpow.pop %v835
        %v837 = vmul.f32 %v824, 1.442695
        %v838 = vpow.pop %v837
        %v839 = vmul.f32 %v825, 1.442695
        %v840 = vpow.pop %v839
        %v841 = vmul.f32 %v826, 1.442695
        %v842 = vpow.pop %v841
        %v843 = vmul.f32 %v827, 1.442695
        %v844 = vpow.pop %v843
        %v845 = vmul.f32 %v828, 1.442695
        %v846 = vpow.pop %v845
        %v847 = vmul.f32 %v829, 1.442695
        %v848 = vpow.pop %v847
        %v849 = vmul.f32 %v830, 1.442695
        %v850 = vpow.pop %v849
        %v851 = vadd.f32 %v832, 1.0
        %v852 = vadd.f32 %v834, 1.0
        %v853 = vadd.f32 %v836, 1.0
        %v854 = vadd.f32 %v838, 1.0
        %v855 = vadd.f32 %v840, 1.0
        %v856 = vadd.f32 %v842, 1.0
        %v857 = vadd.f32 %v844, 1.0
        %v858 = vadd.f32 %v846, 1.0
        %v859 = vadd.f32 %v848, 1.0
        %v860 = vadd.f32 %v850, 1.0
        %v861 = vrcp.pop %v851
        %v862 = vmul.f32 1.0, %v861
        %v863 = vrcp.pop %v852
        %v864 = vmul.f32 1.0, %v863
        %v865 = vrcp.pop %v853
        %v866 = vmul.f32 1.0, %v865
        %v867 = vrcp.pop %v854
        %v868 = vmul.f32 1.0, %v867
        %v869 = vrcp.pop %v855
        %v870 = vmul.f32 1.0, %v869
        %v871 = vrcp.pop %v856
        %v872 = vmul.f32 1.0, %v871
        %v873 = vrcp.pop %v857
        %v874 = vmul.f32 1.0, %v873
        %v875 = vrcp.pop %v858
        %v876 = vmul.f32 1.0, %v875
        %v877 = vrcp.pop %v859
        %v878 = vmul.f32 1.0, %v877
        %v879 = vrcp.pop %v860
        %v880 = vmul.f32 1.0, %v879
        %v881 = vmul.f32 %v811, %v862
        %v882 = vmul.f32 %v812, %v864
        %v883 = vmul.f32 %v813, %v866
        %v884 = vmul.f32 %v814, %v868
        %v885 = vmul.f32 %v815, %v870
        %v886 = vmul.f32 %v816, %v872
        %v887 = vmul.f32 %v817, %v874
        %v888 = vmul.f32 %v818, %v876
        %v889 = vmul.f32 %v819, %v878
        %v890 = vmul.f32 %v820, %v880
        %v891 = vld [vmem:[%s5] sm:$0xff]
        %v892 = vld [vmem:[%s5 + $0x8] sm:$0xff]
        %v893 = vld [vmem:[%s5 + $0x10] sm:$0xff]
        %v894 = vld [vmem:[%s5 + $0x18] sm:$0xff]
        %v895 = vld [vmem:[%s6] sm:$0x1]
        %v897 = vlaneseq
        %v898 = vshrl.u32 %v897, 7
        %v899 = vsub.s32 0, %v898
        %v900 = vrot.slane %v895, %v899
        %v903 = vsel %vm547, %v881, 0
        %v906 = vsel %vm547, %v882, 0
        %v909 = vsel %vm547, %v883, 0
        %v912 = vsel %vm547, %v884, 0
        %v915 = vsel %vm547, %v885, 0
        %v918 = vsel %vm547, %v886, 0
        %v921 = vsel %vm547, %v887, 0
        %v924 = vsel %vm547, %v888, 0
        %v927 = vsel %vm547, %v889, 0
        %v930 = vsel %vm547, %v890, 0
        %932 = vmatprep.subr.mxu0 0.0
        %933 = vmatpush1.msra.mxu0 %v891
        %934 = vmatprep.subr.mxu0 0.0
        %935 = vmatpush1.msra.mxu0 %v892
        %936 = vmatprep.subr.mxu0 0.0
        %937 = vmatpush1.msra.mxu0 %v893
        %938 = vmatprep.subr.mxu0 0.0
        %939 = vmatpush1.msra.mxu0 %v894
        %940 = vmatprep.subr.mxu0 0.0
        %941 = vmatpush1.msra.mxu0 0.0
        %942 = vmatprep.subr.mxu0 0.0
        %943 = vmatpush1.msra.mxu0 0.0
        %944 = vmatprep.subr.mxu0 0.0
        %945 = vmatpush1.msra.mxu0 0.0
        %946 = vmatprep.subr.mxu0 0.0
        %947 = vmatpush1.msra.mxu0 0.0
        %948 = vmatprep.subr.mxu0 0.0
        %949 = vmatpush1.msra.mxu0 0.0
        %950 = vmatprep.subr.mxu0 0.0
        %951 = vmatpush1.msra.mxu0 0.0
        %952 = vmatprep.subr.mxu0 0.0
        %953 = vmatpush1.msra.mxu0 0.0
        %954 = vmatprep.subr.mxu0 0.0
        %955 = vmatpush1.msra.mxu0 0.0
        %956 = vmatprep.subr.mxu0 0.0
        %957 = vmatpush1.msra.mxu0 0.0
        %958 = vmatprep.subr.mxu0 0.0
        %959 = vmatpush1.msra.mxu0 0.0
        %960 = vmatprep.subr.mxu0 0.0
        %961 = vmatpush1.msra.mxu0 0.0
        %962 = vmatprep.subr.mxu0 0.0
        %963 = vmatpush1.msra.mxu0 0.0
        %964 = vmatprep.subr.mxu0 0.0
        %965 = vmatpush1.msra.mxu0 0.0
        %966 = vmatprep.subr.mxu0 0.0
        %967 = vmatpush1.msra.mxu0 0.0
        %968 = vmatprep.subr.mxu0 0.0
        %969 = vmatpush1.msra.mxu0 0.0
        %970 = vmatprep.subr.mxu0 0.0
        %971 = vmatpush1.msra.mxu0 0.0
        %972 = vmatprep.subr.mxu0 0.0
        %973 = vmatpush1.msra.mxu0 0.0
        %974 = vmatprep.subr.mxu0 0.0
        %975 = vmatpush1.msra.mxu0 0.0
        %976 = vmatprep.subr.mxu0 0.0
        %977 = vmatpush1.msra.mxu0 0.0
        %978 = vmatprep.subr.mxu0 0.0
        %979 = vmatpush1.msra.mxu0 0.0
        %980 = vmatprep.subr.mxu0 0.0
        %981 = vmatpush1.msra.mxu0 0.0
        %982 = vmatprep.subr.mxu0 0.0
        %983 = vmatpush1.msra.mxu0 0.0
        %984 = vmatprep.subr.mxu0 0.0
        %985 = vmatpush1.msra.mxu0 0.0
        %986 = vmatprep.subr.mxu0 0.0
        %987 = vmatpush1.msra.mxu0 0.0
        %988 = vmatprep.subr.mxu0 0.0
        %989 = vmatpush1.msra.mxu0 0.0
        %990 = vmatprep.subr.mxu0 0.0
        %991 = vmatpush1.msra.mxu0 0.0
        %992 = vmatprep.subr.mxu0 0.0
        %993 = vmatpush1.msra.mxu0 0.0
        %994 = vmatprep.subr.mxu0 0.0
        %995 = vmatpush1.msra.mxu0 0.0
        %996 = vmatprep.mubr.f32.mxu0 0.0
        %997 = vmatmul.mubr.f32.gmra.mrb[0].mxu0 %v903
        %v998 = vpop.f32.mrb[0].mxu0
        %v999 = vadd.f32 %v900, %v998
        %v1000 = vpop.f32.mrb[0].mxu0
        %1001 = vmatprep.mubr.f32.mxu0 0.0
        %1002 = vmatmul.mubr.f32.gmra.mrb[0].mxu0 %v906
        %v1003 = vpop.f32.mrb[0].mxu0
        %v1004 = vadd.f32 %v900, %v1003
        %v1005 = vpop.f32.mrb[0].mxu0
        %1006 = vmatprep.mubr.f32.mxu0 0.0
        %1007 = vmatmul.mubr.f32.gmra.mrb[0].mxu0 %v909
        %v1008 = vpop.f32.mrb[0].mxu0
        %v1009 = vadd.f32 %v900, %v1008
        %v1010 = vpop.f32.mrb[0].mxu0
        %1011 = vmatprep.mubr.f32.mxu0 0.0
        %1012 = vmatmul.mubr.f32.gmra.mrb[0].mxu0 %v912
        %v1013 = vpop.f32.mrb[0].mxu0
        %v1014 = vadd.f32 %v900, %v1013
        %v1015 = vpop.f32.mrb[0].mxu0
        %1016 = vmatprep.mubr.f32.mxu0 0.0
        %1017 = vmatmul.mubr.f32.gmra.mrb[0].mxu0 %v915
        %v1018 = vpop.f32.mrb[0].mxu0
        %v1019 = vadd.f32 %v900, %v1018
        %v1020 = vpop.f32.mrb[0].mxu0
        %1021 = vmatprep.mubr.f32.mxu0 0.0
        %1022 = vmatmul.mubr.f32.gmra.mrb[0].mxu0 %v918
        %v1023 = vpop.f32.mrb[0].mxu0
        %v1024 = vadd.f32 %v900, %v1023
        %v1025 = vpop.f32.mrb[0].mxu0
        %1026 = vmatprep.mubr.f32.mxu0 0.0
        %1027 = vmatmul.mubr.f32.gmra.mrb[0].mxu0 %v921
        %v1028 = vpop.f32.mrb[0].mxu0
        %v1029 = vadd.f32 %v900, %v1028
        %v1030 = vpop.f32.mrb[0].mxu0
        %1031 = vmatprep.mubr.f32.mxu0 0.0
        %1032 = vmatmul.mubr.f32.gmra.mrb[0].mxu0 %v924
        %v1033 = vpop.f32.mrb[0].mxu0
        %v1034 = vadd.f32 %v900, %v1033
        %v1035 = vpop.f32.mrb[0].mxu0
        %1036 = vmatprep.mubr.f32.mxu0 0.0
        %1037 = vmatmul.mubr.f32.gmra.mrb[0].mxu0 %v927
        %v1038 = vpop.f32.mrb[0].mxu0
        %v1039 = vadd.f32 %v900, %v1038
        %v1040 = vpop.f32.mrb[0].mxu0
        %1041 = vmatprep.mubr.f32.mxu0 0.0
        %1042 = vmatmul.mubr.f32.gmra.mrb[0].mxu0 %v930
        %v1043 = vpop.f32.mrb[0].mxu0
        %v1044 = vadd.f32 %v900, %v1043
        %v1045 = vpop.f32.mrb[0].mxu0
        %1046 = vdwg.mxu0
        %v1047 = vxor.u32 %v999, 2147483648
        %v1048 = vxor.u32 %v1004, 2147483648
        %v1049 = vxor.u32 %v1009, 2147483648
        %v1050 = vxor.u32 %v1014, 2147483648
        %v1051 = vxor.u32 %v1019, 2147483648
        %v1052 = vxor.u32 %v1024, 2147483648
        %v1053 = vxor.u32 %v1029, 2147483648
        %v1054 = vxor.u32 %v1034, 2147483648
        %v1055 = vxor.u32 %v1039, 2147483648
        %v1056 = vxor.u32 %v1044, 2147483648
        %v1057 = vmul.f32 %v1047, 1.442695
        %v1058 = vpow.pop %v1057
        %v1059 = vmul.f32 %v1048, 1.442695
        %v1060 = vpow.pop %v1059
        %v1061 = vmul.f32 %v1049, 1.442695
        %v1062 = vpow.pop %v1061
        %v1063 = vmul.f32 %v1050, 1.442695
        %v1064 = vpow.pop %v1063
        %v1065 = vmul.f32 %v1051, 1.442695
        %v1066 = vpow.pop %v1065
        %v1067 = vmul.f32 %v1052, 1.442695
        %v1068 = vpow.pop %v1067
        %v1069 = vmul.f32 %v1053, 1.442695
        %v1070 = vpow.pop %v1069
        %v1071 = vmul.f32 %v1054, 1.442695
        %v1072 = vpow.pop %v1071
        %v1073 = vmul.f32 %v1055, 1.442695
        %v1074 = vpow.pop %v1073
        %v1075 = vmul.f32 %v1056, 1.442695
        %v1076 = vpow.pop %v1075
        %v1077 = vadd.f32 %v1058, 1.0
        %v1078 = vadd.f32 %v1060, 1.0
        %v1079 = vadd.f32 %v1062, 1.0
        %v1080 = vadd.f32 %v1064, 1.0
        %v1081 = vadd.f32 %v1066, 1.0
        %v1082 = vadd.f32 %v1068, 1.0
        %v1083 = vadd.f32 %v1070, 1.0
        %v1084 = vadd.f32 %v1072, 1.0
        %v1085 = vadd.f32 %v1074, 1.0
        %v1086 = vadd.f32 %v1076, 1.0
        %v1087 = vrcp.pop %v1077
        %v1088 = vmul.f32 1.0, %v1087
        %v1089 = vrcp.pop %v1078
        %v1090 = vmul.f32 1.0, %v1089
        %v1091 = vrcp.pop %v1079
        %v1092 = vmul.f32 1.0, %v1091
        %v1093 = vrcp.pop %v1080
        %v1094 = vmul.f32 1.0, %v1093
        %v1095 = vrcp.pop %v1081
        %v1096 = vmul.f32 1.0, %v1095
        %v1097 = vrcp.pop %v1082
        %v1098 = vmul.f32 1.0, %v1097
        %v1099 = vrcp.pop %v1083
        %v1100 = vmul.f32 1.0, %v1099
        %v1101 = vrcp.pop %v1084
        %v1102 = vmul.f32 1.0, %v1101
        %v1103 = vrcp.pop %v1085
        %v1104 = vmul.f32 1.0, %v1103
        %v1105 = vrcp.pop %v1086
        %v1106 = vmul.f32 1.0, %v1105
        %v1107 = vmul.f32 %v999, %v1088
        %v1108 = vmul.f32 %v1004, %v1090
        %v1109 = vmul.f32 %v1009, %v1092
        %v1110 = vmul.f32 %v1014, %v1094
        %v1111 = vmul.f32 %v1019, %v1096
        %v1112 = vmul.f32 %v1024, %v1098
        %v1113 = vmul.f32 %v1029, %v1100
        %v1114 = vmul.f32 %v1034, %v1102
        %v1115 = vmul.f32 %v1039, %v1104
        %v1116 = vmul.f32 %v1044, %v1106
        %1117 = vset.pattern.permute.xlu0 33
        %1118 = vperm.xlu0 %1117, %v629
        %v1119 = vpop.permute.xlu0 %1118
        %1121 = vset.pattern.permute.xlu0 33
        %1122 = vperm.xlu0 %1121, %v630
        %v1123 = vpop.permute.xlu0 %1122
        %1125 = vset.pattern.permute.xlu0 33
        %1126 = vperm.xlu0 %1125, %v631
        %v1127 = vpop.permute.xlu0 %1126
        %1129 = vset.pattern.permute.xlu0 33
        %1130 = vperm.xlu0 %1129, %v632
        %v1131 = vpop.permute.xlu0 %1130
        %1133 = vset.pattern.permute.xlu0 33
        %1134 = vperm.xlu0 %1133, %v633
        %v1135 = vpop.permute.xlu0 %1134
        %1137 = vset.pattern.permute.xlu0 33
        %1138 = vperm.xlu0 %1137, %v634
        %v1139 = vpop.permute.xlu0 %1138
        %1141 = vset.pattern.permute.xlu0 33
        %1142 = vperm.xlu0 %1141, %v635
        %v1143 = vpop.permute.xlu0 %1142
        %1145 = vset.pattern.permute.xlu0 33
        %1146 = vperm.xlu0 %1145, %v636
        %v1147 = vpop.permute.xlu0 %1146
        %1149 = vset.pattern.permute.xlu0 33
        %1150 = vperm.xlu0 %1149, %v637
        %v1151 = vpop.permute.xlu0 %1150
        %1153 = vset.pattern.permute.xlu0 33
        %1154 = vperm.xlu0 %1153, %v638
        %v1155 = vpop.permute.xlu0 %1154
        %v1157 = vmul.f32 %v1107, %v1119
        %v1158 = vmul.f32 %v1108, %v1123
        %v1159 = vmul.f32 %v1109, %v1127
        %v1160 = vmul.f32 %v1110, %v1131
        %v1161 = vmul.f32 %v1111, %v1135
        %v1162 = vmul.f32 %v1112, %v1139
        %v1163 = vmul.f32 %v1113, %v1143
        %v1164 = vmul.f32 %v1114, %v1147
        %v1165 = vmul.f32 %v1115, %v1151
        %v1166 = vmul.f32 %v1116, %v1155
        %vm1167 = vcmask 130048
        %v1168 = vsel %vm1167, %v1157, 0.0
        %v1169 = vsel %vm1167, %v1159, 0.0
        %v1170 = vadd.f32 %v1168, %v1169
        %v1171 = vsel %vm1167, %v1161, 0.0
        %v1172 = vadd.f32 %v1170, %v1171
        %v1173 = vsel %vm1167, %v1163, 0.0
        %v1174 = vadd.f32 %v1172, %v1173
        %v1175 = vsel %vm1167, %v1165, 0.0
        %v1176 = vadd.f32 %v1174, %v1175
        %v1177 = vsel %vm1167, %v1158, 0.0
        %v1178 = vsel %vm1167, %v1160, 0.0
        %v1179 = vadd.f32 %v1177, %v1178
        %v1180 = vsel %vm1167, %v1162, 0.0
        %v1181 = vadd.f32 %v1179, %v1180
        %v1182 = vsel %vm1167, %v1164, 0.0
        %v1183 = vadd.f32 %v1181, %v1182
        %v1184 = vsel %vm1167, %v1166, 0.0
        %v1185 = vadd.f32 %v1183, %v1184
        %v1186 = vld [vmem:[%s7] sm:$0xff]
        %v1187 = vld [vmem:[%s7 + $0x8] sm:$0xff]
        %v1188 = vld [vmem:[%s7 + $0x10] sm:$0xff]
        %v1189 = vld [vmem:[%s7 + $0x18] sm:$0xff]
        %v1190 = vld [vmem:[%s8] sm:$0xff]
        %v1191 = vld [vmem:[%s8 + $0x8] sm:$0xff]
        %v1193 = vsel %vm1167, %v1176, 0
        %v1196 = vsel %vm1167, %v1185, 0
        %1198 = vmatprep.subr.mxu0 0.0
        %1199 = vmatpush1.msra.mxu0 %v1190
        %1200 = vmatprep.subr.mxu0 0.0
        %1201 = vmatpush1.msra.mxu0 %v1191
        %1202 = vmatprep.subr.mxu0 0.0
        %1203 = vmatpush1.msra.mxu0 0.0
        %1204 = vmatprep.subr.mxu0 0.0
        %1205 = vmatpush1.msra.mxu0 0.0
        %1206 = vmatprep.subr.mxu0 0.0
        %1207 = vmatpush1.msra.mxu0 0.0
        %1208 = vmatprep.subr.mxu0 0.0
        %1209 = vmatpush1.msra.mxu0 0.0
        %1210 = vmatprep.subr.mxu0 0.0
        %1211 = vmatpush1.msra.mxu0 0.0
        %1212 = vmatprep.subr.mxu0 0.0
        %1213 = vmatpush1.msra.mxu0 0.0
        %1214 = vmatprep.subr.mxu0 0.0
        %1215 = vmatpush1.msra.mxu0 0.0
        %1216 = vmatprep.subr.mxu0 0.0
        %1217 = vmatpush1.msra.mxu0 0.0
        %1218 = vmatprep.subr.mxu0 0.0
        %1219 = vmatpush1.msra.mxu0 0.0
        %1220 = vmatprep.subr.mxu0 0.0
        %1221 = vmatpush1.msra.mxu0 0.0
        %1222 = vmatprep.subr.mxu0 0.0
        %1223 = vmatpush1.msra.mxu0 0.0
        %1224 = vmatprep.subr.mxu0 0.0
        %1225 = vmatpush1.msra.mxu0 0.0
        %1226 = vmatprep.subr.mxu0 0.0
        %1227 = vmatpush1.msra.mxu0 0.0
        %1228 = vmatprep.subr.mxu0 0.0
        %1229 = vmatpush1.msra.mxu0 0.0
        %1230 = vmatprep.subr.mxu0 0.0
        %1231 = vmatpush1.msra.mxu0 0.0
        %1232 = vmatprep.subr.mxu0 0.0
        %1233 = vmatpush1.msra.mxu0 0.0
        %1234 = vmatprep.subr.mxu0 0.0
        %1235 = vmatpush1.msra.mxu0 0.0
        %1236 = vmatprep.subr.mxu0 0.0
        %1237 = vmatpush1.msra.mxu0 0.0
        %1238 = vmatprep.subr.mxu0 0.0
        %1239 = vmatpush1.msra.mxu0 0.0
        %1240 = vmatprep.subr.mxu0 0.0
        %1241 = vmatpush1.msra.mxu0 0.0
        %1242 = vmatprep.subr.mxu0 0.0
        %1243 = vmatpush1.msra.mxu0 0.0
        %1244 = vmatprep.subr.mxu0 0.0
        %1245 = vmatpush1.msra.mxu0 0.0
        %1246 = vmatprep.subr.mxu0 0.0
        %1247 = vmatpush1.msra.mxu0 0.0
        %1248 = vmatprep.subr.mxu0 0.0
        %1249 = vmatpush1.msra.mxu0 0.0
        %1250 = vmatprep.subr.mxu0 0.0
        %1251 = vmatpush1.msra.mxu0 0.0
        %1252 = vmatprep.subr.mxu0 0.0
        %1253 = vmatpush1.msra.mxu0 0.0
        %1254 = vmatprep.subr.mxu0 0.0
        %1255 = vmatpush1.msra.mxu0 0.0
        %1256 = vmatprep.subr.mxu0 0.0
        %1257 = vmatpush1.msra.mxu0 0.0
        %1258 = vmatprep.subr.mxu0 0.0
        %1259 = vmatpush1.msra.mxu0 0.0
        %1260 = vmatprep.subr.mxu0 0.0
        %1261 = vmatpush1.msra.mxu0 0.0
        %1262 = vmatprep.mubr.f32.mxu0 0.0
        %1263 = vmatmul.mubr.f32.gmra.mrb[0].mxu0 %v1193
        %v1264 = vpop.f32.mrb[0].mxu0
        %v1265 = vadd.f32 0.0, %v1264
        %v1266 = vpop.f32.mrb[0].mxu0
        %1267 = vmatprep.mubr.f32.mxu0 0.0
        %1268 = vmatmul.mubr.f32.gmra.mrb[0].mxu0 %v1196
        %v1269 = vpop.f32.mrb[0].mxu0
        %v1270 = vadd.f32 0.0, %v1269
        %v1271 = vpop.f32.mrb[0].mxu0
        %1272 = vdwg.mxu0
        %1273 = vmatprep.subr.mxu0 0.0
        %1274 = vmatpush1.msra.mxu0 %v1186
        %1275 = vmatprep.subr.mxu0 0.0
        %1276 = vmatpush1.msra.mxu0 %v1187
        %1277 = vmatprep.subr.mxu0 0.0
        %1278 = vmatpush1.msra.mxu0 %v1188
        %1279 = vmatprep.subr.mxu0 0.0
        %1280 = vmatpush1.msra.mxu0 %v1189
        %1281 = vmatprep.subr.mxu0 0.0
        %1282 = vmatpush1.msra.mxu0 0.0
        %1283 = vmatprep.subr.mxu0 0.0
        %1284 = vmatpush1.msra.mxu0 0.0
        %1285 = vmatprep.subr.mxu0 0.0
        %1286 = vmatpush1.msra.mxu0 0.0
        %1287 = vmatprep.subr.mxu0 0.0
        %1288 = vmatpush1.msra.mxu0 0.0
        %1289 = vmatprep.subr.mxu0 0.0
        %1290 = vmatpush1.msra.mxu0 0.0
        %1291 = vmatprep.subr.mxu0 0.0
        %1292 = vmatpush1.msra.mxu0 0.0
        %1293 = vmatprep.subr.mxu0 0.0
        %1294 = vmatpush1.msra.mxu0 0.0
        %1295 = vmatprep.subr.mxu0 0.0
        %1296 = vmatpush1.msra.mxu0 0.0
        %1297 = vmatprep.subr.mxu0 0.0
        %1298 = vmatpush1.msra.mxu0 0.0
        %1299 = vmatprep.subr.mxu0 0.0
        %1300 = vmatpush1.msra.mxu0 0.0
        %1301 = vmatprep.subr.mxu0 0.0
        %1302 = vmatpush1.msra.mxu0 0.0
        %1303 = vmatprep.subr.mxu0 0.0
        %1304 = vmatpush1.msra.mxu0 0.0
        %1305 = vmatprep.subr.mxu0 0.0
        %1306 = vmatpush1.msra.mxu0 0.0
        %1307 = vmatprep.subr.mxu0 0.0
        %1308 = vmatpush1.msra.mxu0 0.0
        %1309 = vmatprep.subr.mxu0 0.0
        %1310 = vmatpush1.msra.mxu0 0.0
        %1311 = vmatprep.subr.mxu0 0.0
        %1312 = vmatpush1.msra.mxu0 0.0
        %1313 = vmatprep.subr.mxu0 0.0
        %1314 = vmatpush1.msra.mxu0 0.0
        %1315 = vmatprep.subr.mxu0 0.0
        %1316 = vmatpush1.msra.mxu0 0.0
        %1317 = vmatprep.subr.mxu0 0.0
        %1318 = vmatpush1.msra.mxu0 0.0
        %1319 = vmatprep.subr.mxu0 0.0
        %1320 = vmatpush1.msra.mxu0 0.0
        %1321 = vmatprep.subr.mxu0 0.0
        %1322 = vmatpush1.msra.mxu0 0.0
        %1323 = vmatprep.subr.mxu0 0.0
        %1324 = vmatpush1.msra.mxu0 0.0
        %1325 = vmatprep.subr.mxu0 0.0
        %1326 = vmatpush1.msra.mxu0 0.0
        %1327 = vmatprep.subr.mxu0 0.0
        %1328 = vmatpush1.msra.mxu0 0.0
        %1329 = vmatprep.subr.mxu0 0.0
        %1330 = vmatpush1.msra.mxu0 0.0
        %1331 = vmatprep.subr.mxu0 0.0
        %1332 = vmatpush1.msra.mxu0 0.0
        %1333 = vmatprep.subr.mxu0 0.0
        %1334 = vmatpush1.msra.mxu0 0.0
        %1335 = vmatprep.subr.mxu0 0.0
        %1336 = vmatpush1.msra.mxu0 0.0
        %1337 = vmatprep.mubr.f32.mxu0 0.0
        %1338 = vmatmul.mubr.f32.gmra.mrb[0].mxu0 %v549
        %v1339 = vpop.f32.mrb[0].mxu0
        %v1340 = vadd.f32 %v1265, %v1339
        %v1341 = vpop.f32.mrb[0].mxu0
        %1342 = vmatprep.mubr.f32.mxu0 0.0
        %1343 = vmatmul.mubr.f32.gmra.mrb[0].mxu0 %v552
        %v1344 = vpop.f32.mrb[0].mxu0
        %v1345 = vadd.f32 %v1270, %v1344
        %v1346 = vpop.f32.mrb[0].mxu0
        %1347 = vdwg.mxu0
        %v1348 = vld [vmem:[%s9] sm:$0x1]
        %v1350 = vlaneseq
        %v1351 = vshrl.u32 %v1350, 7
        %v1352 = vsub.s32 0, %v1351
        %v1353 = vrot.slane %v1348, %v1352
        %v1355 = vadd.f32 %v1340, %v1353
        %v1356 = vadd.f32 %v1345, %v1353
        %v1357 = vxor.u32 %v1355, 2147483648
        %v1358 = vxor.u32 %v1356, 2147483648
        %v1359 = vmul.f32 %v1357, 1.442695
        %v1360 = vpow.pop %v1359
        %v1361 = vmul.f32 %v1358, 1.442695
        %v1362 = vpow.pop %v1361
        %v1363 = vadd.f32 %v1360, 1.0
        %v1364 = vadd.f32 %v1362, 1.0
        %v1365 = vrcp.pop %v1363
        %v1366 = vmul.f32 1.0, %v1365
        %v1367 = vrcp.pop %v1364
        %v1368 = vmul.f32 1.0, %v1367
        %v1369 = vmul.f32 %v1355, %v1366
        %v1370 = vmul.f32 %v1356, %v1368
        %v1371 = vld [vmem:[%s10] sm:$0xff]
        %v1372 = vld [vmem:[%s10 + $0x8] sm:$0xff]
        %v1373 = vld [vmem:[%s10 + $0x10] sm:$0xff]
        %v1374 = vld [vmem:[%s10 + $0x18] sm:$0xff]
        %v1375 = vld [vmem:[%s10 + $0x20] sm:$0xff]
        %v1376 = vld [vmem:[%s10 + $0x28] sm:$0xff]
        %v1377 = vld [vmem:[%s10 + $0x30] sm:$0xff]
        %v1378 = vld [vmem:[%s10 + $0x38] sm:$0xff]
        %v1379 = vld [vmem:[%s11] sm:$0x1]
        %v1381 = vlaneseq
        %v1382 = vshrl.u32 %v1381, 7
        %v1383 = vsub.s32 0, %v1382
        %v1384 = vrot.slane %v1379, %v1383
        %vm1386 = vcmask 523264
        %v1388 = vsel %vm1386, %v1369, 0
        %v1391 = vsel %vm1386, %v1370, 0
        %1393 = vmatprep.subr.mxu0 0.0
        %1394 = vmatpush1.msra.mxu0 %v1371
        %1395 = vmatprep.subr.mxu0 0.0
        %1396 = vmatpush1.msra.mxu0 %v1372
        %1397 = vmatprep.subr.mxu0 0.0
        %1398 = vmatpush1.msra.mxu0 %v1373
        %1399 = vmatprep.subr.mxu0 0.0
        %1400 = vmatpush1.msra.mxu0 %v1374
        %1401 = vmatprep.subr.mxu0 0.0
        %1402 = vmatpush1.msra.mxu0 %v1375
        %1403 = vmatprep.subr.mxu0 0.0
        %1404 = vmatpush1.msra.mxu0 %v1376
        %1405 = vmatprep.subr.mxu0 0.0
        %1406 = vmatpush1.msra.mxu0 %v1377
        %1407 = vmatprep.subr.mxu0 0.0
        %1408 = vmatpush1.msra.mxu0 %v1378
        %1409 = vmatprep.subr.mxu0 0.0
        %1410 = vmatpush1.msra.mxu0 0.0
        %1411 = vmatprep.subr.mxu0 0.0
        %1412 = vmatpush1.msra.mxu0 0.0
        %1413 = vmatprep.subr.mxu0 0.0
        %1414 = vmatpush1.msra.mxu0 0.0
        %1415 = vmatprep.subr.mxu0 0.0
        %1416 = vmatpush1.msra.mxu0 0.0
        %1417 = vmatprep.subr.mxu0 0.0
        %1418 = vmatpush1.msra.mxu0 0.0
        %1419 = vmatprep.subr.mxu0 0.0
        %1420 = vmatpush1.msra.mxu0 0.0
        %1421 = vmatprep.subr.mxu0 0.0
        %1422 = vmatpush1.msra.mxu0 0.0
        %1423 = vmatprep.subr.mxu0 0.0
        %1424 = vmatpush1.msra.mxu0 0.0
        %1425 = vmatprep.subr.mxu0 0.0
        %1426 = vmatpush1.msra.mxu0 0.0
        %1427 = vmatprep.subr.mxu0 0.0
        %1428 = vmatpush1.msra.mxu0 0.0
        %1429 = vmatprep.subr.mxu0 0.0
        %1430 = vmatpush1.msra.mxu0 0.0
        %1431 = vmatprep.subr.mxu0 0.0
        %1432 = vmatpush1.msra.mxu0 0.0
        %1433 = vmatprep.subr.mxu0 0.0
        %1434 = vmatpush1.msra.mxu0 0.0
        %1435 = vmatprep.subr.mxu0 0.0
        %1436 = vmatpush1.msra.mxu0 0.0
        %1437 = vmatprep.subr.mxu0 0.0
        %1438 = vmatpush1.msra.mxu0 0.0
        %1439 = vmatprep.subr.mxu0 0.0
        %1440 = vmatpush1.msra.mxu0 0.0
        %1441 = vmatprep.subr.mxu0 0.0
        %1442 = vmatpush1.msra.mxu0 0.0
        %1443 = vmatprep.subr.mxu0 0.0
        %1444 = vmatpush1.msra.mxu0 0.0
        %1445 = vmatprep.subr.mxu0 0.0
        %1446 = vmatpush1.msra.mxu0 0.0
        %1447 = vmatprep.subr.mxu0 0.0
        %1448 = vmatpush1.msra.mxu0 0.0
        %1449 = vmatprep.subr.mxu0 0.0
        %1450 = vmatpush1.msra.mxu0 0.0
        %1451 = vmatprep.subr.mxu0 0.0
        %1452 = vmatpush1.msra.mxu0 0.0
        %1453 = vmatprep.subr.mxu0 0.0
        %1454 = vmatpush1.msra.mxu0 0.0
        %1455 = vmatprep.subr.mxu0 0.0
        %1456 = vmatpush1.msra.mxu0 0.0
        %1457 = vmatprep.mubr.f32.mxu0 0.0
        %1458 = vmatmul.mubr.f32.gmra.mrb[0].mxu0 %v1388
        %v1459 = vpop.f32.mrb[0].mxu0
        %v1460 = vadd.f32 %v1384, %v1459
        %v1461 = vpop.f32.mrb[0].mxu0
        %1462 = vmatprep.mubr.f32.mxu0 0.0
        %1463 = vmatmul.mubr.f32.gmra.mrb[0].mxu0 %v1391
        %v1464 = vpop.f32.mrb[0].mxu0
        %v1465 = vadd.f32 %v1384, %v1464
        %v1466 = vpop.f32.mrb[0].mxu0
        %1467 = vdwg.mxu0
        %v1468 = vadd.f32 %v1460, %v541
        %v1469 = vadd.f32 %v1465, %v542
        %1470 = vst.msk [vmem:[%s537] sm:$0xff] %vm547, %v1468
        %1471 = vst.msk [vmem:[%s537 + $0x8] sm:$0xff] %vm547, %v1469
        %s1472 = sand.u32 %s300, 1
        %s1473 = scalar_lea.sflag [#allocation4], %s1472
        %s1474 = sand.u32 %s300, 1
        %s1475 = smul.addr %s1474, 16
        %s1476 = scalar_lea.vmem [#allocation8], %s1475
        // Predicated region
        $region115: #{tpu_custom_call.1} parent=101 // pred_check
          %p1477 = pneg %p310
        $region116: #{tpu_custom_call.1} parent=101 // pred_check_branch
          %1479 = sbr.rel (%p1477) target = $region118
        $region117: #{tpu_custom_call.1} parent=101 // pred_region
          %s1480 = smul.u32 2, %s30
          %s1482 = ssub.s32 256, 256
          %1483 = vsyncadd %s1473, %s1482
          %s1484 = smul.addr %s1480, 128
          %s1485 = scalar_lea.hbm %s12, %s1484
          %s1486 = sshll.u32 %s1476, 4
          %s1487 = int_to_ptr.vmem [resolvable:$true] %s1486
          %1492 = dma.vmem_to_hbm [thread:$0]  %s1487, 256, %s1485, %s1473, 128, 128, 8
        $region118: #{tpu_custom_call.1} parent=101 // pred_fallthru
          _
      $region102: #{tpu_custom_call.1} parent=5 // pred_fallthru
        _
      %p1493 = scmp.le.s32.totalorder 2, %s25
      // Predicated region
      $region119: #{tpu_custom_call.1} parent=5 // pred_check
        %p1494 = pneg %p1493
      $region120: #{tpu_custom_call.1} parent=5 // pred_check_branch
        %1496 = sbr.rel (%p1494) target = $region122
      $region121: #{tpu_custom_call.1} parent=5 // pred_region
        %s1497 = ssub.s32 %s25, 2
        // Predicated region
        $region123: #{tpu_custom_call.1} parent=121 // pred_check
          %p1498 = pneg %p316
        $region124: #{tpu_custom_call.1} parent=121 // pred_check_branch
          %1500 = sbr.rel (%p1498) target = $region126
        $region125: #{tpu_custom_call.1} parent=121 // pred_region
          %s1501 = sand.u32 %s301, 1
          %s1502 = scalar_lea.sflag [#allocation4], %s1501
          %s1503 = sand.u32 %s301, 1
          %s1504 = smul.addr %s1503, 16
          %s1505 = scalar_lea.vmem [#allocation8], %s1504
          %1506 = dma.done %s1502, 256
        $region126: #{tpu_custom_call.1} parent=121 // pred_fallthru
          _
      $region122: #{tpu_custom_call.1} parent=5 // pred_fallthru
        _
    $region6: #{tpu_custom_call.1} parent=1 // loop_footer
      %s29 = sadd.s32 1, %s25
    $region7: #{tpu_custom_call.1} parent=1 // loop_footer_branch
      %24 = sbr.rel target = $region3
    $region8: #{tpu_custom_call.1} parent=1 // loop_exit
      _
    %1507 = vsyncpa [#allocation3], 1
    %s1508 = scalar_lea.sflag [#allocation3], 1
    %1509 = vsyncpa %s1508, 1
    %1510 = vsyncpa [#allocation7], 1
    %1511 = vsyncpa [#allocation4], 1
    %s1512 = scalar_lea.sflag [#allocation4], 1
    %1513 = vsyncpa %s1512, 1

</llo_original>
